<compile_context>
chip_gen: v6e
topology: v6e:2x2x1
jax: 0.10.0
libtpu: 0.0.40
codegen_flags: <defaults>
</compile_context>

<pallas_src>
import functools

import jax
import jax.numpy as jnp
from jax import lax
from jax.experimental import pallas as pl
from jax.experimental.pallas import tpu as pltpu


# ----------------------------------------------------------------------------
# Fused Pallas kernel: conv3x3 -> ReLU -> conv3x3 -> residual add
# ----------------------------------------------------------------------------
def _resblock_kernel(x_ref, w1_ref, b1_ref, w2_ref, b2_ref, o_ref,
                     p1_ref, p2_ref, *, H, W, C, GB):
    """One program = GB (b, t) slices.

    x_ref : (GB, H, W*C)        f32   input slab (lane-dense, unpadded)
    w*_ref: (3, W*C, W*C)       bf16  banded weights (one band per kernel row)
    b*_ref: (1, W*C)            f32   bias tiled across W
    o_ref : (GB, H, W*C)        f32   output slab
    p*_ref: (GB, H+2, W*C)      bf16  VMEM staging buffers with zero halo rows
    """
    M = GB * H
    N = W * C

    # ---- stage x into row-padded bf16 buffer (single cast) -------------------
    p1_ref[...] = jnp.zeros_like(p1_ref)                       # zero halo rows
    p1_ref[:, 1:H + 1, :] = x_ref[...].astype(jnp.bfloat16)

    # ---- conv1: 3 banded matmuls over row-shifted views (+bias, ReLU) --------
    acc1 = jnp.zeros((M, N), jnp.float32)
    for di in range(3):
        lhs = p1_ref[:, di:di + H, :].reshape(M, N)            # (GB*H, W*C) bf16
        acc1 = acc1 + jnp.dot(lhs, w1_ref[di],
                              preferred_element_type=jnp.float32)
    h1 = jnp.maximum(acc1 + b1_ref[...], 0.0)

    # ---- stage h1 (bf16, single cast); halo rows stay zero --------------------
    p2_ref[...] = jnp.zeros_like(p2_ref)
    p2_ref[:, 1:H + 1, :] = h1.astype(jnp.bfloat16).reshape(GB, H, N)

    # ---- conv2 (+bias) ---------------------------------------------------------
    acc2 = jnp.zeros((M, N), jnp.float32)
    for di in range(3):
        lhs = p2_ref[:, di:di + H, :].reshape(M, N)
        acc2 = acc2 + jnp.dot(lhs, w2_ref[di],
                              preferred_element_type=jnp.float32)
    y = acc2 + b2_ref[...]

    # ---- residual add (exact f32 x) + lane-dense store -------------------------
    o_ref[...] = x_ref[...] + y.reshape(GB, H, N)


# ----------------------------------------------------------------------------
# Banded weight construction (wrapper side, runs once per jit trace)
# ----------------------------------------------------------------------------
def _band_weight(w, W, C):
    """PyTorch Conv3d weight (O, I, 1, 3, 3) -> 3 banded (W*C, W*C) bf16 matrices.

    band[di, j'*C + ci, j*C + co] = w[co, ci, di, j'-j+1]  if |j'-j| <= 1 else 0
    so that   out_row(i) = sum_di  x_row(i+di-1) @ band[di]
    reproduces the pad-1 3x3 conv with width padding baked into the band.
    """
    wt = jnp.transpose(w[:, :, 0], (2, 3, 1, 0))               # (di, dj, ci, co)
    jp = jnp.arange(W)[:, None, None]                          # j' (input col)
    jo = jnp.arange(W)[None, :, None]                          # j  (output col)
    dj = jnp.arange(3)[None, None, :]
    sel = (jp == jo + dj - 1).astype(w.dtype)                  # (W, W, 3)
    band = jnp.einsum('pjd,edio->epijo', sel, wt)              # (3, W, C, W, C)
    return band.reshape(3, W * C, W * C).astype(jnp.bfloat16)


# ----------------------------------------------------------------------------
# Forward wrapper: layout glue + single pallas_call
# ----------------------------------------------------------------------------
def resblock2d_3d_forward(x, w1, b1, w2, b2):
    """x: (B, C, T, H, W) f32.  Weights in PyTorch Conv3d layout (O, I, 1, 3, 3)."""
    B, C, T, H, W = x.shape
    G = B * T
    N = W * C

    # NCTHW -> (B*T, H, W*C): single relayout, no HBM pad.
    xg = jnp.transpose(x, (0, 2, 3, 4, 1)).reshape(G, H, N)

    w1b = _band_weight(w1, W, C)
    w2b = _band_weight(w2, W, C)
    b1v = jnp.tile(b1.astype(jnp.float32), W).reshape(1, N)
    b2v = jnp.tile(b2.astype(jnp.float32), W).reshape(1, N)

    # grid=(2,) parallel: both v7x TensorCores busy; ~free extra step on v5e/v6e.
    nprog = 2 if (G % 2 == 0 and G >= 2) else 1
    GB = G // nprog

    flops = 2 * 3 * 2 * G * H * N * N          # 2 convs x 3 banded matmuls
    bytes_accessed = 2 * xg.size * 4 + (w1b.size + w2b.size) * 2 \
        + (b1v.size + b2v.size) * 4

    out = pl.pallas_call(
        functools.partial(_resblock_kernel, H=H, W=W, C=C, GB=GB),
        out_shape=jax.ShapeDtypeStruct((G, H, N), jnp.float32),
        grid=(nprog,),
        in_specs=[
            pl.BlockSpec((GB, H, N), lambda g: (g, 0, 0)),
            pl.BlockSpec((3, N, N), lambda g: (0, 0, 0)),
            pl.BlockSpec((1, N), lambda g: (0, 0)),
            pl.BlockSpec((3, N, N), lambda g: (0, 0, 0)),
            pl.BlockSpec((1, N), lambda g: (0, 0)),
        ],
        out_specs=pl.BlockSpec((GB, H, N), lambda g: (g, 0, 0)),
        scratch_shapes=[
            pltpu.VMEM((GB, H + 2, N), jnp.bfloat16),
            pltpu.VMEM((GB, H + 2, N), jnp.bfloat16),
        ],
        compiler_params=pltpu.CompilerParams(
            dimension_semantics=("parallel",)),
        cost_estimate=pl.CostEstimate(
            flops=flops, transcendentals=0, bytes_accessed=bytes_accessed),
    )(xg, w1b, b1v, w2b, b2v)

    # (B*T, H, W*C) -> (B, C, T, H, W)
    return jnp.transpose(out.reshape(B, T, H, W, C), (0, 4, 1, 2, 3))


# ----------------------------------------------------------------------------
# Pure-JAX reference (for correctness check only)
# ----------------------------------------------------------------------------
def _reference_forward(x, w1, b1, w2, b2):
    B, C, T, H, W = x.shape
    x2d = jnp.transpose(x, (0, 2, 1, 3, 4)).reshape(B * T, C, H, W)

    def conv(inp, w, b):
        y = lax.conv_general_dilated(
            inp, w[:, :, 0], (1, 1), ((1, 1), (1, 1)),
            dimension_numbers=("NCHW", "OIHW", "NCHW"))
        return y + b[None, :, None, None]

    h = jnp.maximum(conv(x2d, w1, b1), 0.0)
    y = conv(h, w2, b2) + x2d
    return jnp.transpose(y.reshape(B, T, C, H, W), (0, 2, 1, 3, 4))


if __name__ == "__main__":
    # args.nf = 16; input [B, C, T, H, W] = [2, 16, 4, 16, 16]
    nf, B, T, H, W = 16, 2, 4, 16, 16

    key = jax.random.PRNGKey(0)
    kx, kw1, kb1, kw2, kb2 = jax.random.split(key, 5)

    fan_in = float(nf * 3 * 3)
    w1 = jax.random.normal(kw1, (nf, nf, 1, 3, 3), jnp.float32) / jnp.sqrt(fan_in)
    b1 = jax.random.normal(kb1, (nf,), jnp.float32) * 0.01
    w2 = jax.random.normal(kw2, (nf, nf, 1, 3, 3), jnp.float32) / jnp.sqrt(fan_in)
    b2 = jax.random.normal(kb2, (nf,), jnp.float32) * 0.01
    x = jax.random.normal(kx, (B, nf, T, H, W), jnp.float32)

    forward = jax.jit(resblock2d_3d_forward)
    out = jax.block_until_ready(forward(x, w1, b1, w2, b2))

    assert out.shape == (B, nf, T, H, W), out.shape
    assert bool(jnp.isfinite(out).all())

    ref = _reference_forward(x, w1, b1, w2, b2)
    max_err = float(jnp.max(jnp.abs(out - ref)))
    # bf16 MXU operands, f32 accumulation -> expected max abs error ~1e-2.
    assert max_err < 1e-1, f"max abs error vs reference: {max_err}"

    print("KERNEL_OK")
</pallas_src>

<mosaic_0001>
module attributes {stable_mosaic.version = 11 : i64} {
  func.func @_resblock_kernel(%arg0: i32, %arg1: memref<4x16x256xf32, #tpu.memory_space<vmem>>, %arg2: memref<3x256x256xbf16, #tpu.memory_space<vmem>>, %arg3: memref<1x256xf32, #tpu.memory_space<vmem>>, %arg4: memref<3x256x256xbf16, #tpu.memory_space<vmem>>, %arg5: memref<1x256xf32, #tpu.memory_space<vmem>>, %arg6: memref<4x16x256xf32, #tpu.memory_space<vmem>>, %arg7: memref<4x18x256xbf16, #tpu.memory_space<vmem>>, %arg8: memref<4x18x256xbf16, #tpu.memory_space<vmem>>) attributes {dimension_semantics = [#tpu.dimension_semantics<parallel>], iteration_bounds = array<i64: 2>, scalar_prefetch = 0 : i64, scratch_operands = 2 : i64, tpu.core_type = #tpu.core_type<tc>, window_params = [{transform_indices = @transform_0, window_bounds = array<i64: 4, 16, 256>}, {pipeline_mode = #tpu.pipeline_mode<synchronous>, transform_indices = @transform_1, window_bounds = array<i64: 3, 256, 256>}, {pipeline_mode = #tpu.pipeline_mode<synchronous>, transform_indices = @transform_2, window_bounds = array<i64: 1, 256>}, {pipeline_mode = #tpu.pipeline_mode<synchronous>, transform_indices = @transform_3, window_bounds = array<i64: 3, 256, 256>}, {pipeline_mode = #tpu.pipeline_mode<synchronous>, transform_indices = @transform_4, window_bounds = array<i64: 1, 256>}, {transform_indices = @transform_5, window_bounds = array<i64: 4, 16, 256>}]} {
    %cst = arith.constant 0.000000e+00 : bf16
    %0 = vector.broadcast %cst : bf16 to vector<4x18x256xbf16>
    %c0 = arith.constant 0 : index
    %c0_0 = arith.constant 0 : index
    %c0_1 = arith.constant 0 : index
    %1 = vector.load %arg7[%c0, %c0_0, %c0_1] : memref<4x18x256xbf16, #tpu.memory_space<vmem>>, vector<4x18x256xbf16>
    tpu.vector_store %arg7[%c0, %c0_0, %c0_1], %0 {strides = array<i32>} : memref<4x18x256xbf16, #tpu.memory_space<vmem>>, vector<4x18x256xbf16>,
    %c0_2 = arith.constant 0 : index
    %c0_3 = arith.constant 0 : index
    %c0_4 = arith.constant 0 : index
    %2 = vector.load %arg1[%c0_2, %c0_3, %c0_4] : memref<4x16x256xf32, #tpu.memory_space<vmem>>, vector<4x16x256xf32>
    %3 = arith.truncf %2 : vector<4x16x256xf32> to vector<4x16x256xbf16>
    %c0_5 = arith.constant 0 : index
    %c1 = arith.constant 1 : index
    %c0_6 = arith.constant 0 : index
    %4 = vector.load %arg7[%c0_5, %c1, %c0_6] : memref<4x18x256xbf16, #tpu.memory_space<vmem>>, vector<4x16x256xbf16>
    tpu.vector_store %arg7[%c0_5, %c1, %c0_6], %3 {strides = array<i32>} : memref<4x18x256xbf16, #tpu.memory_space<vmem>>, vector<4x16x256xbf16>,
    %cst_7 = arith.constant 0.000000e+00 : f32
    %5 = vector.broadcast %cst_7 : f32 to vector<64x256xf32>
    %c0_8 = arith.constant 0 : index
    %c0_9 = arith.constant 0 : index
    %c0_10 = arith.constant 0 : index
    %6 = vector.load %arg7[%c0_8, %c0_9, %c0_10] : memref<4x18x256xbf16, #tpu.memory_space<vmem>>, vector<4x16x256xbf16>
    %7 = vector.shape_cast %6 : vector<4x16x256xbf16> to vector<64x256xbf16>
    %c0_11 = arith.constant 0 : index
    %c0_12 = arith.constant 0 : index
    %c0_13 = arith.constant 0 : index
    %8 = vector.load %arg2[%c0_11, %c0_12, %c0_13] : memref<3x256x256xbf16, #tpu.memory_space<vmem>>, vector<1x256x256xbf16>
    %9 = vector.shape_cast %8 : vector<1x256x256xbf16> to vector<256x256xbf16>
    %cst_14 = arith.constant dense<0.000000e+00> : vector<64x256xf32>
    %10 = tpu.matmul %7, %9, %cst_14 {dimension_numbers = #tpu.dot_dimension_numbers<[1], [0], [0], [1], [0, 0, 1, 1], [], []>} : vector<64x256xbf16>, vector<256x256xbf16>, vector<64x256xf32> -> vector<64x256xf32>
    %11 = arith.addf %5, %10 : vector<64x256xf32>
    %c0_15 = arith.constant 0 : index
    %c1_16 = arith.constant 1 : index
    %c0_17 = arith.constant 0 : index
    %12 = vector.load %arg7[%c0_15, %c1_16, %c0_17] : memref<4x18x256xbf16, #tpu.memory_space<vmem>>, vector<4x16x256xbf16>
    %13 = vector.shape_cast %12 : vector<4x16x256xbf16> to vector<64x256xbf16>
    %c1_18 = arith.constant 1 : index
    %c0_19 = arith.constant 0 : index
    %c0_20 = arith.constant 0 : index
    %14 = vector.load %arg2[%c1_18, %c0_19, %c0_20] : memref<3x256x256xbf16, #tpu.memory_space<vmem>>, vector<1x256x256xbf16>
    %15 = vector.shape_cast %14 : vector<1x256x256xbf16> to vector<256x256xbf16>
    %cst_21 = arith.constant dense<0.000000e+00> : vector<64x256xf32>
    %16 = tpu.matmul %13, %15, %cst_21 {dimension_numbers = #tpu.dot_dimension_numbers<[1], [0], [0], [1], [0, 0, 1, 1], [], []>} : vector<64x256xbf16>, vector<256x256xbf16>, vector<64x256xf32> -> vector<64x256xf32>
    %17 = arith.addf %11, %16 : vector<64x256xf32>
    %c0_22 = arith.constant 0 : index
    %c2 = arith.constant 2 : index
    %c0_23 = arith.constant 0 : index
    %18 = vector.load %arg7[%c0_22, %c2, %c0_23] : memref<4x18x256xbf16, #tpu.memory_space<vmem>>, vector<4x16x256xbf16>
    %19 = vector.shape_cast %18 : vector<4x16x256xbf16> to vector<64x256xbf16>
    %c2_24 = arith.constant 2 : index
    %c0_25 = arith.constant 0 : index
    %c0_26 = arith.constant 0 : index
    %20 = vector.load %arg2[%c2_24, %c0_25, %c0_26] : memref<3x256x256xbf16, #tpu.memory_space<vmem>>, vector<1x256x256xbf16>
    %21 = vector.shape_cast %20 : vector<1x256x256xbf16> to vector<256x256xbf16>
    %cst_27 = arith.constant dense<0.000000e+00> : vector<64x256xf32>
    %22 = tpu.matmul %19, %21, %cst_27 {dimension_numbers = #tpu.dot_dimension_numbers<[1], [0], [0], [1], [0, 0, 1, 1], [], []>} : vector<64x256xbf16>, vector<256x256xbf16>, vector<64x256xf32> -> vector<64x256xf32>
    %23 = arith.addf %17, %22 : vector<64x256xf32>
    %c0_28 = arith.constant 0 : index
    %c0_29 = arith.constant 0 : index
    %24 = vector.load %arg3[%c0_28, %c0_29] : memref<1x256xf32, #tpu.memory_space<vmem>>, vector<1x256xf32>
    %25 = vector.broadcast %24 : vector<1x256xf32> to vector<64x256xf32>
    %26 = arith.addf %23, %25 : vector<64x256xf32>
    %cst_30 = arith.constant 0.000000e+00 : f32
    %27 = vector.broadcast %cst_30 : f32 to vector<64x256xf32>
    %28 = arith.maximumf %26, %27 : vector<64x256xf32>
    %cst_31 = arith.constant 0.000000e+00 : bf16
    %29 = vector.broadcast %cst_31 : bf16 to vector<4x18x256xbf16>
    %c0_32 = arith.constant 0 : index
    %c0_33 = arith.constant 0 : index
    %c0_34 = arith.constant 0 : index
    %30 = vector.load %arg8[%c0_32, %c0_33, %c0_34] : memref<4x18x256xbf16, #tpu.memory_space<vmem>>, vector<4x18x256xbf16>
    tpu.vector_store %arg8[%c0_32, %c0_33, %c0_34], %29 {strides = array<i32>} : memref<4x18x256xbf16, #tpu.memory_space<vmem>>, vector<4x18x256xbf16>,
    %31 = arith.truncf %28 : vector<64x256xf32> to vector<64x256xbf16>
    %32 = vector.shape_cast %31 : vector<64x256xbf16> to vector<4x16x256xbf16>
    %c0_35 = arith.constant 0 : index
    %c1_36 = arith.constant 1 : index
    %c0_37 = arith.constant 0 : index
    %33 = vector.load %arg8[%c0_35, %c1_36, %c0_37] : memref<4x18x256xbf16, #tpu.memory_space<vmem>>, vector<4x16x256xbf16>
    tpu.vector_store %arg8[%c0_35, %c1_36, %c0_37], %32 {strides = array<i32>} : memref<4x18x256xbf16, #tpu.memory_space<vmem>>, vector<4x16x256xbf16>,
    %cst_38 = arith.constant 0.000000e+00 : f32
    %34 = vector.broadcast %cst_38 : f32 to vector<64x256xf32>
    %c0_39 = arith.constant 0 : index
    %c0_40 = arith.constant 0 : index
    %c0_41 = arith.constant 0 : index
    %35 = vector.load %arg8[%c0_39, %c0_40, %c0_41] : memref<4x18x256xbf16, #tpu.memory_space<vmem>>, vector<4x16x256xbf16>
    %36 = vector.shape_cast %35 : vector<4x16x256xbf16> to vector<64x256xbf16>
    %c0_42 = arith.constant 0 : index
    %c0_43 = arith.constant 0 : index
    %c0_44 = arith.constant 0 : index
    %37 = vector.load %arg4[%c0_42, %c0_43, %c0_44] : memref<3x256x256xbf16, #tpu.memory_space<vmem>>, vector<1x256x256xbf16>
    %38 = vector.shape_cast %37 : vector<1x256x256xbf16> to vector<256x256xbf16>
    %cst_45 = arith.constant dense<0.000000e+00> : vector<64x256xf32>
    %39 = tpu.matmul %36, %38, %cst_45 {dimension_numbers = #tpu.dot_dimension_numbers<[1], [0], [0], [1], [0, 0, 1, 1], [], []>} : vector<64x256xbf16>, vector<256x256xbf16>, vector<64x256xf32> -> vector<64x256xf32>
    %40 = arith.addf %34, %39 : vector<64x256xf32>
    %c0_46 = arith.constant 0 : index
    %c1_47 = arith.constant 1 : index
    %c0_48 = arith.constant 0 : index
    %41 = vector.load %arg8[%c0_46, %c1_47, %c0_48] : memref<4x18x256xbf16, #tpu.memory_space<vmem>>, vector<4x16x256xbf16>
    %42 = vector.shape_cast %41 : vector<4x16x256xbf16> to vector<64x256xbf16>
    %c1_49 = arith.constant 1 : index
    %c0_50 = arith.constant 0 : index
    %c0_51 = arith.constant 0 : index
    %43 = vector.load %arg4[%c1_49, %c0_50, %c0_51] : memref<3x256x256xbf16, #tpu.memory_space<vmem>>, vector<1x256x256xbf16>
    %44 = vector.shape_cast %43 : vector<1x256x256xbf16> to vector<256x256xbf16>
    %cst_52 = arith.constant dense<0.000000e+00> : vector<64x256xf32>
    %45 = tpu.matmul %42, %44, %cst_52 {dimension_numbers = #tpu.dot_dimension_numbers<[1], [0], [0], [1], [0, 0, 1, 1], [], []>} : vector<64x256xbf16>, vector<256x256xbf16>, vector<64x256xf32> -> vector<64x256xf32>
    %46 = arith.addf %40, %45 : vector<64x256xf32>
    %c0_53 = arith.constant 0 : index
    %c2_54 = arith.constant 2 : index
    %c0_55 = arith.constant 0 : index
    %47 = vector.load %arg8[%c0_53, %c2_54, %c0_55] : memref<4x18x256xbf16, #tpu.memory_space<vmem>>, vector<4x16x256xbf16>
    %48 = vector.shape_cast %47 : vector<4x16x256xbf16> to vector<64x256xbf16>
    %c2_56 = arith.constant 2 : index
    %c0_57 = arith.constant 0 : index
    %c0_58 = arith.constant 0 : index
    %49 = vector.load %arg4[%c2_56, %c0_57, %c0_58] : memref<3x256x256xbf16, #tpu.memory_space<vmem>>, vector<1x256x256xbf16>
    %50 = vector.shape_cast %49 : vector<1x256x256xbf16> to vector<256x256xbf16>
    %cst_59 = arith.constant dense<0.000000e+00> : vector<64x256xf32>
    %51 = tpu.matmul %48, %50, %cst_59 {dimension_numbers = #tpu.dot_dimension_numbers<[1], [0], [0], [1], [0, 0, 1, 1], [], []>} : vector<64x256xbf16>, vector<256x256xbf16>, vector<64x256xf32> -> vector<64x256xf32>
    %52 = arith.addf %46, %51 : vector<64x256xf32>
    %c0_60 = arith.constant 0 : index
    %c0_61 = arith.constant 0 : index
    %53 = vector.load %arg5[%c0_60, %c0_61] : memref<1x256xf32, #tpu.memory_space<vmem>>, vector<1x256xf32>
    %54 = vector.broadcast %53 : vector<1x256xf32> to vector<64x256xf32>
    %55 = arith.addf %52, %54 : vector<64x256xf32>
    %c0_62 = arith.constant 0 : index
    %c0_63 = arith.constant 0 : index
    %c0_64 = arith.constant 0 : index
    %56 = vector.load %arg1[%c0_62, %c0_63, %c0_64] : memref<4x16x256xf32, #tpu.memory_space<vmem>>, vector<4x16x256xf32>
    %57 = vector.shape_cast %55 : vector<64x256xf32> to vector<4x16x256xf32>
    %58 = arith.addf %56, %57 : vector<4x16x256xf32>
    %c0_65 = arith.constant 0 : index
    %c0_66 = arith.constant 0 : index
    %c0_67 = arith.constant 0 : index
    %59 = vector.load %arg6[%c0_65, %c0_66, %c0_67] : memref<4x16x256xf32, #tpu.memory_space<vmem>>, vector<4x16x256xf32>
    tpu.vector_store %arg6[%c0_65, %c0_66, %c0_67], %58 {strides = array<i32>} : memref<4x16x256xf32, #tpu.memory_space<vmem>>, vector<4x16x256xf32>,
    return
  }
  func.func @transform_0(%arg0: i32) -> (i32, i32, i32) {
    %c0_i32 = arith.constant 0 : i32
    %c0_i32_0 = arith.constant 0 : i32
    %c0_i32_1 = arith.constant 0 : i32
    return %arg0, %c0_i32, %c0_i32_0 : i32, i32, i32
  }
  func.func @transform_1(%arg0: i32) -> (i32, i32, i32) {
    %c0_i32 = arith.constant 0 : i32
    %c0_i32_0 = arith.constant 0 : i32
    %c0_i32_1 = arith.constant 0 : i32
    %c0_i32_2 = arith.constant 0 : i32
    return %c0_i32, %c0_i32_0, %c0_i32_1 : i32, i32, i32
  }
  func.func @transform_2(%arg0: i32) -> (i32, i32) {
    %c0_i32 = arith.constant 0 : i32
    %c0_i32_0 = arith.constant 0 : i32
    %c0_i32_1 = arith.constant 0 : i32
    return %c0_i32, %c0_i32_0 : i32, i32
  }
  func.func @transform_3(%arg0: i32) -> (i32, i32, i32) {
    %c0_i32 = arith.constant 0 : i32
    %c0_i32_0 = arith.constant 0 : i32
    %c0_i32_1 = arith.constant 0 : i32
    %c0_i32_2 = arith.constant 0 : i32
    return %c0_i32, %c0_i32_0, %c0_i32_1 : i32, i32, i32
  }
  func.func @transform_4(%arg0: i32) -> (i32, i32) {
    %c0_i32 = arith.constant 0 : i32
    %c0_i32_0 = arith.constant 0 : i32
    %c0_i32_1 = arith.constant 0 : i32
    return %c0_i32, %c0_i32_0 : i32, i32
  }
  func.func @transform_5(%arg0: i32) -> (i32, i32, i32) {
    %c0_i32 = arith.constant 0 : i32
    %c0_i32_0 = arith.constant 0 : i32
    %c0_i32_1 = arith.constant 0 : i32
    return %arg0, %c0_i32, %c0_i32_0 : i32, i32, i32
  }
}

</mosaic_0001>

<llo_original>
// kernel: tile.13
$region0: #{tile.13}
  #allocation0 [shape = 's32[1]{0}', space=sflag, size = 0x4, scoped, tag = 'scoped memory for tile.13']
  %s0 = inlined_call_operand.vmem [shape: f32[16], index: 0, kind: input, shape index: {}]
  %s1 = inlined_call_operand.vmem [shape: f32[16,16], index: 1, kind: output, shape index: {}]
  // Predicated region
  $region2: #{tile.13} parent=0 // pred_check
    _
  $region3: #{tile.13} parent=0 // pred_check_branch
    %3 = sbr.rel (0) target = $region5
  $region4: #{tile.13} parent=0 // pred_region
    _
  $region5: #{tile.13} parent=0 // pred_fallthru
    _
  %v4 = vld [vmem:[%s0] ss:$0 sm:$0xff]
  %5 = vst [vmem:[%s1] sm:$0xff] %v4
  %s6 = scalar_lea.vmem %s1, 8
  %7 = vst [vmem:[%s6] sm:$0xff] %v4

// kernel: tile.14
$region0: #{tile.14}
  %s0 = inlined_call_operand.vmem [shape: f32[16,16], index: 0, kind: input, shape index: {}]
  %s1 = inlined_call_operand.vmem [shape: f32[1,256], index: 1, kind: output, shape index: {}]
  $region1: #{tile.14} parent=0
    #allocation0 [shape = 'u8[8192]{0}', space=vmem, size = 0x2000, scoped, tag = 'scoped mem for output reshape']
    %s2 = smov 3
    %v3 = vld [vmem:[%s0] ss:$8 sm:%s2]
    %vm4 = vcmask 130048
    %5 = vst.msk [vmem:[#allocation0] ss:$8 sm:$0x3] %vm4, %v3
    %s6 = scalar_lea.vmem %s0, 7
    %s7 = smov 3
    %v8 = vld [vmem:[%s6] ss:$8 sm:%s7]
    %9 = vrot.lane.b32.xlu0 %v8, 112
    %v10 = vpop.permute.xlu0 %9
    %vm11 = vcmask 1048448
    %12 = vst.msk [vmem:[#allocation0] ss:$8 sm:$0x3] %vm11, %v10
    %s13 = scalar_lea.vmem %s0, 6
    %s14 = smov 3
    %v15 = vld [vmem:[%s13] ss:$8 sm:%s14]
    %16 = vrot.lane.b32.xlu0 %v15, 96
    %v17 = vpop.permute.xlu0 %16
    %vm18 = vcmask 917248
    %19 = vst.msk [vmem:[#allocation0] ss:$8 sm:$0x3] %vm18, %v17
    %s20 = scalar_lea.vmem %s0, 5
    %s21 = smov 3
    %v22 = vld [vmem:[%s20] ss:$8 sm:%s21]
    %23 = vrot.lane.b32.xlu0 %v22, 80
    %v24 = vpop.permute.xlu0 %23
    %vm25 = vcmask 786048
    %26 = vst.msk [vmem:[#allocation0] ss:$8 sm:$0x3] %vm25, %v24
    %s27 = scalar_lea.vmem %s0, 4
    %s28 = smov 3
    %v29 = vld [vmem:[%s27] ss:$8 sm:%s28]
    %30 = vrot.lane.b32.xlu0 %v29, 64
    %v31 = vpop.permute.xlu0 %30
    %vm32 = vcmask 654848
    %33 = vst.msk [vmem:[#allocation0] ss:$8 sm:$0x3] %vm32, %v31
    %s34 = scalar_lea.vmem %s0, 3
    %s35 = smov 3
    %v36 = vld [vmem:[%s34] ss:$8 sm:%s35]
    %37 = vrot.lane.b32.xlu0 %v36, 48
    %v38 = vpop.permute.xlu0 %37
    %vm39 = vcmask 523648
    %40 = vst.msk [vmem:[#allocation0] ss:$8 sm:$0x3] %vm39, %v38
    %s41 = scalar_lea.vmem %s0, 2
    %s42 = smov 3
    %v43 = vld [vmem:[%s41] ss:$8 sm:%s42]
    %44 = vrot.lane.b32.xlu0 %v43, 32
    %v45 = vpop.permute.xlu0 %44
    %vm46 = vcmask 392448
    %47 = vst.msk [vmem:[#allocation0] ss:$8 sm:$0x3] %vm46, %v45
    %s48 = scalar_lea.vmem %s0, 1
    %s49 = smov 3
    %v50 = vld [vmem:[%s48] ss:$8 sm:%s49]
    %51 = vrot.lane.b32.xlu0 %v50, 16
    %v52 = vpop.permute.xlu0 %51
    %vm53 = vcmask 261248
    %54 = vst.msk [vmem:[#allocation0] ss:$8 sm:$0x3] %vm53, %v52
    %s56 = sshll.u32 1, 1
    %s57 = ssub.s32 %s56, 1
    %v59 = vld [vmem:[#allocation0] sm:%s57]
    %s60 = sshll.u32 1, 1
    %s61 = ssub.s32 %s60, 1
    %62 = vst [vmem:[%s1] sm:%s61] %v59
    %s63 = scalar_lea.vmem [#allocation0], 8
    %v64 = vld [vmem:[%s63] sm:%s57]
    %s65 = sshll.u32 1, 1
    %s66 = ssub.s32 %s65, 1
    %s67 = scalar_lea.vmem %s1, 1
    %68 = vst [vmem:[%s67] sm:%s66] %v64

// kernel: resblock2d_3d_forward.1
$region0: #{resblock2d_3d_forward.1}
  #allocation0 [shape = 'u32[]', space=smem, size = 0x4, offset = 0x4, fixed_abs, tag = 'smem constant byte address 0x4 - core index']
  #allocation1 [shape = 'u32[144,128]{1,0:T(1,128)}', space=vmem, size = 0x12000, scoped, tag = 'internal scratch']
  #allocation2 [shape = 'bf16[4,18,256]{2,1,0:T(8,128)(2,1)}', space=vmem, size = 0xc000, scoped, tag = 'scratch operand']
  #allocation3 [shape = 'bf16[4,18,256]{2,1,0:T(8,128)(2,1)}', space=vmem, size = 0xc000, scoped, tag = 'scratch operand']
  %s0 = inlined_call_operand.vmem [shape: f32[8,16,256], index: 0, kind: input, shape index: {}]
  %s1 = inlined_call_operand.vmem [shape: bf16[3,256,256], index: 1, kind: input, shape index: {}]
  %s2 = inlined_call_operand.vmem [shape: f32[1,256], index: 2, kind: input, shape index: {}]
  %s3 = inlined_call_operand.vmem [shape: bf16[3,256,256], index: 3, kind: input, shape index: {}]
  %s4 = inlined_call_operand.vmem [shape: f32[1,256], index: 4, kind: input, shape index: {}]
  %s5 = inlined_call_operand.vmem [shape: f32[8,16,256], index: 5, kind: output, shape index: {}]
  %s6 = sld [smem:[#allocation0]]
  $region53: #{resblock2d_3d_forward.1} parent=0
    _
  %s8 = ssub.s32 1, %s6
  %s9 = scalar_select 0, %s8, %s6
  loop: start=0, step=1, limit=4
  $region2: #{resblock2d_3d_forward.1} parent=0 // loop_pre_header
    _
  $region3: #{resblock2d_3d_forward.1} parent=0 // loop_header
    %s11 = sphi 0, %s15
    %p12 = scmp.ge.s32.totalorder %s11, 4
    %s21 = sphi 0, %s23
    %s24 = sphi 0, %s21
    %s25 = sphi 0, %s24
    %s41 = sphi 0, %s25
    %s45 = sphi 0, %s45
    %s47 = sphi 0, %s45
    %s48 = sphi 0, %s47
    %s62 = sphi 0, %s48
    %s66 = sphi 0, %s66
    %s68 = sphi 0, %s66
    %s69 = sphi 0, %s68
    %s83 = sphi 0, %s69
    %s87 = sphi 0, %s87
    %s89 = sphi 0, %s87
    %s90 = sphi 0, %s89
    %s104 = sphi 0, %s90
    %s108 = sphi 0, %s108
    %s110 = sphi 0, %s108
    %s111 = sphi 0, %s110
    %s125 = sphi 0, %s111
    %s131 = sphi 0, %s133
    %s134 = sphi 0, %s131
    %s135 = sphi 0, %s134
    %s151 = sphi 0, %s135
  $region4: #{resblock2d_3d_forward.1} parent=0 // loop_header_branch
    %14 = sbr.rel (%p12) target = $region8
  $region5: #{resblock2d_3d_forward.1} parent=0 // loop_body
    %s16 = ssub.s32 %s11, 1
    %s17 = ssub.s32 %s11, 2
    %s18 = sadd.s32 %s11, 1
    %s19 = ssub.s32 %s11, %s18
    %p20 = scmp.eq.s32.totalorder %s19, 0
    %s22 = sadd.s32 %s21, 1
    %s23 = scalar_select %p20, %s21, %s22
    %p26 = pneg %p20
    %p27 = scmp.eq.s32.totalorder %s11, 1
    %p28 = por %p26, %p27
    %p29 = scmp.ne.s32.totalorder %s21, %s24
    %p30 = scmp.eq.s32.totalorder %s11, 0
    %p31 = por %p29, %p30
    %p32 = scmp.ne.s32.totalorder %s21, %s24
    %p33 = scmp.eq.s32.totalorder %s16, 1
    %p34 = por %p32, %p33
    %p35 = scmp.ne.s32.totalorder %s24, %s25
    %p36 = scmp.eq.s32.totalorder %s16, 0
    %p37 = por %p35, %p36
    %p38 = scmp.ne.s32.totalorder %s24, %s25
    %p39 = scmp.eq.s32.totalorder %s17, 1
    %p40 = por %p38, %p39
    %p42 = scmp.ne.s32.totalorder %s25, %s41
    %p43 = scmp.eq.s32.totalorder %s17, 0
    %p44 = por %p42, %p43
    %s46 = sadd.s32 %s45, 1
    %p49 = scmp.eq.s32.totalorder %s11, 1
    %p50 = scmp.ne.s32.totalorder %s45, %s47
    %p51 = scmp.eq.s32.totalorder %s11, 0
    %p52 = por %p50, %p51
    %p53 = scmp.ne.s32.totalorder %s45, %s47
    %p54 = scmp.eq.s32.totalorder %s16, 1
    %p55 = por %p53, %p54
    %p56 = scmp.ne.s32.totalorder %s47, %s48
    %p57 = scmp.eq.s32.totalorder %s16, 0
    %p58 = por %p56, %p57
    %p59 = scmp.ne.s32.totalorder %s47, %s48
    %p60 = scmp.eq.s32.totalorder %s17, 1
    %p61 = por %p59, %p60
    %p63 = scmp.ne.s32.totalorder %s48, %s62
    %p64 = scmp.eq.s32.totalorder %s17, 0
    %p65 = por %p63, %p64
    %s67 = sadd.s32 %s66, 1
    %p70 = scmp.eq.s32.totalorder %s11, 1
    %p71 = scmp.ne.s32.totalorder %s66, %s68
    %p72 = scmp.eq.s32.totalorder %s11, 0
    %p73 = por %p71, %p72
    %p74 = scmp.ne.s32.totalorder %s66, %s68
    %p75 = scmp.eq.s32.totalorder %s16, 1
    %p76 = por %p74, %p75
    %p77 = scmp.ne.s32.totalorder %s68, %s69
    %p78 = scmp.eq.s32.totalorder %s16, 0
    %p79 = por %p77, %p78
    %p80 = scmp.ne.s32.totalorder %s68, %s69
    %p81 = scmp.eq.s32.totalorder %s17, 1
    %p82 = por %p80, %p81
    %p84 = scmp.ne.s32.totalorder %s69, %s83
    %p85 = scmp.eq.s32.totalorder %s17, 0
    %p86 = por %p84, %p85
    %s88 = sadd.s32 %s87, 1
    %p91 = scmp.eq.s32.totalorder %s11, 1
    %p92 = scmp.ne.s32.totalorder %s87, %s89
    %p93 = scmp.eq.s32.totalorder %s11, 0
    %p94 = por %p92, %p93
    %p95 = scmp.ne.s32.totalorder %s87, %s89
    %p96 = scmp.eq.s32.totalorder %s16, 1
    %p97 = por %p95, %p96
    %p98 = scmp.ne.s32.totalorder %s89, %s90
    %p99 = scmp.eq.s32.totalorder %s16, 0
    %p100 = por %p98, %p99
    %p101 = scmp.ne.s32.totalorder %s89, %s90
    %p102 = scmp.eq.s32.totalorder %s17, 1
    %p103 = por %p101, %p102
    %p105 = scmp.ne.s32.totalorder %s90, %s104
    %p106 = scmp.eq.s32.totalorder %s17, 0
    %p107 = por %p105, %p106
    %s109 = sadd.s32 %s108, 1
    %p112 = scmp.eq.s32.totalorder %s11, 1
    %p113 = scmp.ne.s32.totalorder %s108, %s110
    %p114 = scmp.eq.s32.totalorder %s11, 0
    %p115 = por %p113, %p114
    %p116 = scmp.ne.s32.totalorder %s108, %s110
    %p117 = scmp.eq.s32.totalorder %s16, 1
    %p118 = por %p116, %p117
    %p119 = scmp.ne.s32.totalorder %s110, %s111
    %p120 = scmp.eq.s32.totalorder %s16, 0
    %p121 = por %p119, %p120
    %p122 = scmp.ne.s32.totalorder %s110, %s111
    %p123 = scmp.eq.s32.totalorder %s17, 1
    %p124 = por %p122, %p123
    %p126 = scmp.ne.s32.totalorder %s111, %s125
    %p127 = scmp.eq.s32.totalorder %s17, 0
    %p128 = por %p126, %p127
    %s129 = ssub.s32 %s11, %s18
    %p130 = scmp.eq.s32.totalorder %s129, 0
    %s132 = sadd.s32 %s131, 1
    %s133 = scalar_select %p130, %s131, %s132
    %p136 = pneg %p130
    %p137 = scmp.eq.s32.totalorder %s11, 1
    %p138 = por %p136, %p137
    %p139 = scmp.ne.s32.totalorder %s131, %s134
    %p140 = scmp.eq.s32.totalorder %s11, 0
    %p141 = por %p139, %p140
    %p142 = scmp.ne.s32.totalorder %s131, %s134
    %p143 = scmp.eq.s32.totalorder %s16, 1
    %p144 = por %p142, %p143
    %p145 = scmp.ne.s32.totalorder %s134, %s135
    %p146 = scmp.eq.s32.totalorder %s16, 0
    %p147 = por %p145, %p146
    %p148 = scmp.ne.s32.totalorder %s134, %s135
    %p149 = scmp.eq.s32.totalorder %s17, 1
    %p150 = por %p148, %p149
    %p152 = scmp.ne.s32.totalorder %s135, %s151
    %p153 = scmp.eq.s32.totalorder %s17, 0
    %p154 = por %p152, %p153
    %p155 = scmp.le.s32.totalorder 1, %s11
    %p156 = scmp.lt.s32.totalorder %s11, 3
    %p157 = pnand %p155, %p156
    %p158 = pneg %p157
    // Predicated region
    $region9: #{resblock2d_3d_forward.1} parent=5 // pred_check
      _
    $region10: #{resblock2d_3d_forward.1} parent=5 // pred_check_branch
      %160 = sbr.rel (%p157) target = $region12
    $region11: #{resblock2d_3d_forward.1} parent=5 // pred_region
      %s161 = ssub.s32 %s11, 1
      // Predicated region
      $region13: #{resblock2d_3d_forward.1} parent=11 // pred_check
        %p162 = pneg %p58
      $region14: #{resblock2d_3d_forward.1} parent=11 // pred_check_branch
        %164 = sbr.rel (%p162) target = $region16
      $region15: #{resblock2d_3d_forward.1} parent=11 // pred_region
        _
      $region16: #{resblock2d_3d_forward.1} parent=11 // pred_fallthru
        _
      // Predicated region
      $region17: #{resblock2d_3d_forward.1} parent=11 // pred_check
        %p165 = pneg %p79
      $region18: #{resblock2d_3d_forward.1} parent=11 // pred_check_branch
        %167 = sbr.rel (%p165) target = $region20
      $region19: #{resblock2d_3d_forward.1} parent=11 // pred_region
        _
      $region20: #{resblock2d_3d_forward.1} parent=11 // pred_fallthru
        _
      // Predicated region
      $region21: #{resblock2d_3d_forward.1} parent=11 // pred_check
        %p168 = pneg %p100
      $region22: #{resblock2d_3d_forward.1} parent=11 // pred_check_branch
        %170 = sbr.rel (%p168) target = $region24
      $region23: #{resblock2d_3d_forward.1} parent=11 // pred_region
        _
      $region24: #{resblock2d_3d_forward.1} parent=11 // pred_fallthru
        _
      // Predicated region
      $region25: #{resblock2d_3d_forward.1} parent=11 // pred_check
        %p171 = pneg %p121
      $region26: #{resblock2d_3d_forward.1} parent=11 // pred_check_branch
        %173 = sbr.rel (%p171) target = $region28
      $region27: #{resblock2d_3d_forward.1} parent=11 // pred_region
        _
      $region28: #{resblock2d_3d_forward.1} parent=11 // pred_fallthru
        _
    $region12: #{resblock2d_3d_forward.1} parent=5 // pred_fallthru
      _
    %p174 = scmp.lt.s32.totalorder %s11, 2
    // Predicated region
    $region29: #{resblock2d_3d_forward.1} parent=5 // pred_check
      %p175 = pneg %p174
    $region30: #{resblock2d_3d_forward.1} parent=5 // pred_check_branch
      %177 = sbr.rel (%p175) target = $region32
    $region31: #{resblock2d_3d_forward.1} parent=5 // pred_region
      // Predicated region
      $region33: #{resblock2d_3d_forward.1} parent=31 // pred_check
        %p178 = pneg %p31
      $region34: #{resblock2d_3d_forward.1} parent=31 // pred_check_branch
        %180 = sbr.rel (%p178) target = $region36
      $region35: #{resblock2d_3d_forward.1} parent=31 // pred_region
        %s181 = smul.u32 4, %s11
        %p182 = scmp.lt.s32.totalorder %s181, 7
        %s183 = scalar_select %p182, %s181, 7
        %s184 = smul.addr %s183, 4
        %s185 = smul.addr %s184, 8
        %s186 = scalar_lea.vmem %s0, %s185
        %s187 = smul.u32 4, %s11
      $region36: #{resblock2d_3d_forward.1} parent=31 // pred_fallthru
        _
    $region32: #{resblock2d_3d_forward.1} parent=5 // pred_fallthru
      _
    %p188 = scmp.le.s32.totalorder 1, %s11
    %p189 = scmp.lt.s32.totalorder %s11, 3
    %p190 = pnand %p188, %p189
    %p191 = pneg %p190
    // Predicated region
    $region37: #{resblock2d_3d_forward.1} parent=5 // pred_check
      _
    $region38: #{resblock2d_3d_forward.1} parent=5 // pred_check_branch
      %193 = sbr.rel (%p190) target = $region40
    $region39: #{resblock2d_3d_forward.1} parent=5 // pred_region
      %s194 = ssub.s32 %s11, 1
      %s195 = smul.u32 4, %s16
      %p196 = scmp.lt.s32.totalorder %s195, 7
      %s197 = scalar_select %p196, %s195, 7
      %s198 = smul.addr %s197, 4
      %s199 = smul.addr %s198, 8
      %s200 = scalar_lea.vmem %s0, %s199
      %p201 = pneg %p37
      %p202 = pneg %p34
      %p203 = pneg %p58
      %p204 = pneg %p55
      %p205 = pneg %p79
      %p206 = pneg %p76
      %p207 = pneg %p100
      %p208 = pneg %p97
      %p209 = pneg %p121
      %p210 = pneg %p118
      %p211 = pneg %p147
      %p212 = pneg %p144
      %s213 = smul.u32 4, %s16
      %p214 = scmp.lt.s32.totalorder %s213, 7
      %s215 = scalar_select %p214, %s213, 7
      %s216 = smul.addr %s215, 4
      %s217 = smul.addr %s216, 8
      %s218 = scalar_lea.vmem %s5, %s217
      %s219 = smul.u32 4, %s16
      %p220 = scmp.lt.s32.totalorder %s219, 7
      %s221 = scalar_select %p220, %s219, 7
      %s222 = smul.addr %s221, 4
      %s223 = smul.addr %s222, 8
      %s224 = scalar_lea.vmem %s0, %s223
      %s225 = smul.u32 4, %s16
      %s226 = smul.u32 4, %s16
      %p227 = scmp.lt.s32.totalorder %s226, 7
      %s228 = scalar_select %p227, %s226, 7
      %s229 = smul.addr %s228, 4
      %s230 = smul.addr %s229, 8
      %s231 = scalar_lea.vmem %s5, %s230
      %s232 = smul.u32 4, %s16
      %234 = vst [vmem:[#allocation2] sm:$0xff] 0
      %235 = vst [vmem:[#allocation2 + $0x8] sm:$0xff] 0
      %236 = vst [vmem:[#allocation2 + $0x10] sm:$0x11] 0
      %237 = vst [vmem:[#allocation2 + $0x18] sm:$0xff] 0
      %238 = vst [vmem:[#allocation2 + $0x20] sm:$0xff] 0
      %239 = vst [vmem:[#allocation2 + $0x28] sm:$0x11] 0
      %240 = vst [vmem:[#allocation2 + $0x30] sm:$0xff] 0
      %241 = vst [vmem:[#allocation2 + $0x38] sm:$0xff] 0
      %242 = vst [vmem:[#allocation2 + $0x40] sm:$0x11] 0
      %243 = vst [vmem:[#allocation2 + $0x48] sm:$0xff] 0
      %244 = vst [vmem:[#allocation2 + $0x50] sm:$0xff] 0
      %245 = vst [vmem:[#allocation2 + $0x58] sm:$0x11] 0
      %v246 = vld [vmem:[%s224] sm:$0xff]
      %v247 = vld [vmem:[%s224 + $0x8] sm:$0xff]
      %v248 = vld [vmem:[%s224 + $0x10] sm:$0xff]
      %v249 = vld [vmem:[%s224 + $0x18] sm:$0xff]
      %v250 = vld [vmem:[%s224 + $0x20] sm:$0xff]
      %v251 = vld [vmem:[%s224 + $0x28] sm:$0xff]
      %v252 = vld [vmem:[%s224 + $0x30] sm:$0xff]
      %v253 = vld [vmem:[%s224 + $0x38] sm:$0xff]
      %v254 = vld [vmem:[%s224 + $0x40] sm:$0xff]
      %v255 = vld [vmem:[%s224 + $0x48] sm:$0xff]
      %v256 = vld [vmem:[%s224 + $0x50] sm:$0xff]
      %v257 = vld [vmem:[%s224 + $0x58] sm:$0xff]
      %v258 = vld [vmem:[%s224 + $0x60] sm:$0xff]
      %v259 = vld [vmem:[%s224 + $0x68] sm:$0xff]
      %v260 = vld [vmem:[%s224 + $0x70] sm:$0xff]
      %v261 = vld [vmem:[%s224 + $0x78] sm:$0xff]
      %v262 = vpack.c.bf16 %v248, %v246
      %v263 = vpack.c.bf16 %v249, %v247
      %v264 = vpack.c.bf16 %v252, %v250
      %v265 = vpack.c.bf16 %v253, %v251
      %v266 = vpack.c.bf16 %v256, %v254
      %v267 = vpack.c.bf16 %v257, %v255
      %v268 = vpack.c.bf16 %v260, %v258
      %v269 = vpack.c.bf16 %v261, %v259
      %v278 = vunpack.c.l.b16 %v262
      %v279 = vunpack.c.l.b16 %v263
      %v280 = vunpack.c.h.b16 %v262
      %v281 = vunpack.c.h.b16 %v263
      %v282 = vunpack.c.l.b16 %v264
      %v283 = vunpack.c.l.b16 %v265
      %v284 = vunpack.c.h.b16 %v264
      %v285 = vunpack.c.h.b16 %v265
      %v286 = vunpack.c.l.b16 %v266
      %v287 = vunpack.c.l.b16 %v267
      %v288 = vunpack.c.h.b16 %v266
      %v289 = vunpack.c.h.b16 %v267
      %v290 = vunpack.c.l.b16 %v268
      %v291 = vunpack.c.l.b16 %v269
      %v292 = vunpack.c.h.b16 %v268
      %v293 = vunpack.c.h.b16 %v269
      %v294 = vpack.c.b16 %v279, %v278
      %v295 = vpack.c.b16 %v281, %v280
      %v296 = vpack.c.b16 %v283, %v282
      %v297 = vpack.c.b16 %v285, %v284
      %v298 = vpack.c.b16 %v287, %v286
      %v299 = vpack.c.b16 %v289, %v288
      %v300 = vpack.c.b16 %v291, %v290
      %v301 = vpack.c.b16 %v293, %v292
      %vm302 = vsmask.f32 256
      %vm303 = vsmask.f32 4368
      %vm304 = vmor %vm302, %vm303
      %v306 = vshrl.u32 %v294, 16
      %v308 = vrot.slane %v306, 7
      %v309 = vshll.u32 %v294, 16
      %v311 = vor.u32 %v308, %v309
      %v312 = vrot.slane %v308, 4
      %v314 = vshrl.u32 %v295, 16
      %v316 = vrot.slane %v314, 7
      %v317 = vshll.u32 %v295, 16
      %v319 = vor.u32 %v316, %v317
      %v320 = vsel %vm304, %v312, %v319
      %v321 = vrot.slane %v316, 4
      %v323 = vshrl.u32 %v296, 16
      %v325 = vrot.slane %v323, 7
      %v326 = vshll.u32 %v296, 16
      %v328 = vor.u32 %v325, %v326
      %v329 = vrot.slane %v325, 4
      %v331 = vshrl.u32 %v297, 16
      %v333 = vrot.slane %v331, 7
      %v334 = vshll.u32 %v297, 16
      %v336 = vor.u32 %v333, %v334
      %v337 = vsel %vm304, %v329, %v336
      %v338 = vrot.slane %v333, 4
      %v340 = vshrl.u32 %v298, 16
      %v342 = vrot.slane %v340, 7
      %v343 = vshll.u32 %v298, 16
      %v345 = vor.u32 %v342, %v343
      %v346 = vrot.slane %v342, 4
      %v348 = vshrl.u32 %v299, 16
      %v350 = vrot.slane %v348, 7
      %v351 = vshll.u32 %v299, 16
      %v353 = vor.u32 %v350, %v351
      %v354 = vsel %vm304, %v346, %v353
      %v355 = vrot.slane %v350, 4
      %v357 = vshrl.u32 %v300, 16
      %v359 = vrot.slane %v357, 7
      %v360 = vshll.u32 %v300, 16
      %v362 = vor.u32 %v359, %v360
      %v363 = vrot.slane %v359, 4
      %v365 = vshrl.u32 %v301, 16
      %v367 = vrot.slane %v365, 7
      %v368 = vshll.u32 %v301, 16
      %v370 = vor.u32 %v367, %v368
      %v371 = vsel %vm304, %v363, %v370
      %v372 = vrot.slane %v367, 4
      %vm385 = vcmask 1043456
      %vm386 = vsmask.f32 7938
      %vm387 = vmand %vm385, %vm386
      %vm388 = vcmask 1047556
      %vm389 = vsmask.f32 7954
      %vm390 = vmand %vm388, %vm389
      %vm391 = vmor %vm390, %vm387
      %v392 = vld [vmem:[#allocation2] sm:$0xff]
      %v393 = vsel %vm391, %v311, %v392
      %394 = vst [vmem:[#allocation2] sm:$0xff] %v393
      %395 = vst [vmem:[#allocation2 + $0x8] sm:$0xff] %v320
      %vm396 = vcmask 1040384
      %vm397 = vmand %vm396, %vm302
      %vm398 = vcmask 1044484
      %vm399 = vsmask.f32 4352
      %vm400 = vmand %vm398, %vm399
      %vm401 = vmor %vm400, %vm397
      %v402 = vld [vmem:[#allocation2 + $0x10] sm:$0x11]
      %v403 = vsel %vm401, %v321, %v402
      %404 = vst [vmem:[#allocation2 + $0x10] sm:$0x11] %v403
      %v405 = vld [vmem:[#allocation2 + $0x18] sm:$0xff]
      %v406 = vsel %vm391, %v328, %v405
      %407 = vst [vmem:[#allocation2 + $0x18] sm:$0xff] %v406
      %408 = vst [vmem:[#allocation2 + $0x20] sm:$0xff] %v337
      %v409 = vld [vmem:[#allocation2 + $0x28] sm:$0x11]
      %v410 = vsel %vm401, %v338, %v409
      %411 = vst [vmem:[#allocation2 + $0x28] sm:$0x11] %v410
      %v412 = vld [vmem:[#allocation2 + $0x30] sm:$0xff]
      %v413 = vsel %vm391, %v345, %v412
      %414 = vst [vmem:[#allocation2 + $0x30] sm:$0xff] %v413
      %415 = vst [vmem:[#allocation2 + $0x38] sm:$0xff] %v354
      %v416 = vld [vmem:[#allocation2 + $0x40] sm:$0x11]
      %v417 = vsel %vm401, %v355, %v416
      %418 = vst [vmem:[#allocation2 + $0x40] sm:$0x11] %v417
      %v419 = vld [vmem:[#allocation2 + $0x48] sm:$0xff]
      %v420 = vsel %vm391, %v362, %v419
      %421 = vst [vmem:[#allocation2 + $0x48] sm:$0xff] %v420
      %422 = vst [vmem:[#allocation2 + $0x50] sm:$0xff] %v371
      %v423 = vld [vmem:[#allocation2 + $0x58] sm:$0x11]
      %v424 = vsel %vm401, %v372, %v423
      %425 = vst [vmem:[#allocation2 + $0x58] sm:$0x11] %v424
      %v426 = vld [vmem:[#allocation2] sm:$0xff]
      %v427 = vld [vmem:[#allocation2 + $0x8] sm:$0xff]
      %v428 = vld [vmem:[#allocation2 + $0x18] sm:$0xff]
      %v429 = vld [vmem:[#allocation2 + $0x20] sm:$0xff]
      %v430 = vld [vmem:[#allocation2 + $0x30] sm:$0xff]
      %v431 = vld [vmem:[#allocation2 + $0x38] sm:$0xff]
      %v432 = vld [vmem:[#allocation2 + $0x48] sm:$0xff]
      %v433 = vld [vmem:[#allocation2 + $0x50] sm:$0xff]
      %v434 = vld [vmem:[%s1] sm:$0xff]
      %v435 = vld [vmem:[%s1 + $0x8] sm:$0xff]
      %v436 = vld [vmem:[%s1 + $0x10] sm:$0xff]
      %v437 = vld [vmem:[%s1 + $0x18] sm:$0xff]
      %v438 = vld [vmem:[%s1 + $0x20] sm:$0xff]
      %v439 = vld [vmem:[%s1 + $0x28] sm:$0xff]
      %v440 = vld [vmem:[%s1 + $0x30] sm:$0xff]
      %v441 = vld [vmem:[%s1 + $0x38] sm:$0xff]
      %v442 = vld [vmem:[%s1 + $0x40] sm:$0xff]
      %v443 = vld [vmem:[%s1 + $0x48] sm:$0xff]
      %v444 = vld [vmem:[%s1 + $0x50] sm:$0xff]
      %v445 = vld [vmem:[%s1 + $0x58] sm:$0xff]
      %v446 = vld [vmem:[%s1 + $0x60] sm:$0xff]
      %v447 = vld [vmem:[%s1 + $0x68] sm:$0xff]
      %v448 = vld [vmem:[%s1 + $0x70] sm:$0xff]
      %v449 = vld [vmem:[%s1 + $0x78] sm:$0xff]
      %v450 = vld [vmem:[%s1 + $0x80] sm:$0xff]
      %v451 = vld [vmem:[%s1 + $0x88] sm:$0xff]
      %v452 = vld [vmem:[%s1 + $0x90] sm:$0xff]
      %v453 = vld [vmem:[%s1 + $0x98] sm:$0xff]
      %v454 = vld [vmem:[%s1 + $0xa0] sm:$0xff]
      %v455 = vld [vmem:[%s1 + $0xa8] sm:$0xff]
      %v456 = vld [vmem:[%s1 + $0xb0] sm:$0xff]
      %v457 = vld [vmem:[%s1 + $0xb8] sm:$0xff]
      %v458 = vld [vmem:[%s1 + $0xc0] sm:$0xff]
      %v459 = vld [vmem:[%s1 + $0xc8] sm:$0xff]
      %v460 = vld [vmem:[%s1 + $0xd0] sm:$0xff]
      %v461 = vld [vmem:[%s1 + $0xd8] sm:$0xff]
      %v462 = vld [vmem:[%s1 + $0xe0] sm:$0xff]
      %v463 = vld [vmem:[%s1 + $0xe8] sm:$0xff]
      %v464 = vld [vmem:[%s1 + $0xf0] sm:$0xff]
      %v465 = vld [vmem:[%s1 + $0xf8] sm:$0xff]
      %v466 = vld [vmem:[#allocation2 + $0x10] sm:$0x11]
      %v467 = vld [vmem:[#allocation2 + $0x28] sm:$0x11]
      %v468 = vld [vmem:[#allocation2 + $0x40] sm:$0x11]
      %v469 = vld [vmem:[#allocation2 + $0x58] sm:$0x11]
      %vm470 = vsmask.f32 3328
      %vm471 = vsmask.f32 7440
      %vm472 = vmor %vm470, %vm471
      %v474 = vshrl.u32 %v426, 16
      %v476 = vrot.slane %v474, 4
      %v477 = vshll.u32 %v426, 16
      %v479 = vrot.slane %v477, 5
      %v480 = vor.u32 %v476, %v479
      %v481 = vrot.slane %v480, 4
      %v483 = vshll.u32 %v427, 16
      %v485 = vrot.slane %v483, 5
      %v486 = vsel %vm472, %v481, %v485
      %v487 = vshrl.u32 %v427, 16
      %v489 = vrot.slane %v487, 4
      %v490 = vor.u32 %v489, %v485
      %v491 = vrot.slane %v490, 4
      %v493 = vshll.u32 %v466, 16
      %v495 = vrot.slane %v493, 5
      %v496 = vsel %vm472, %v491, %v495
      %v498 = vshrl.u32 %v428, 16
      %v500 = vrot.slane %v498, 4
      %v501 = vshll.u32 %v428, 16
      %v503 = vrot.slane %v501, 5
      %v504 = vor.u32 %v500, %v503
      %v505 = vrot.slane %v504, 4
      %v507 = vshll.u32 %v429, 16
      %v509 = vrot.slane %v507, 5
      %v510 = vsel %vm472, %v505, %v509
      %v511 = vshrl.u32 %v429, 16
      %v513 = vrot.slane %v511, 4
      %v514 = vor.u32 %v513, %v509
      %v515 = vrot.slane %v514, 4
      %v517 = vshll.u32 %v467, 16
      %v519 = vrot.slane %v517, 5
      %v520 = vsel %vm472, %v515, %v519
      %v522 = vshrl.u32 %v430, 16
      %v524 = vrot.slane %v522, 4
      %v525 = vshll.u32 %v430, 16
      %v527 = vrot.slane %v525, 5
      %v528 = vor.u32 %v524, %v527
      %v529 = vrot.slane %v528, 4
      %v531 = vshll.u32 %v431, 16
      %v533 = vrot.slane %v531, 5
      %v534 = vsel %vm472, %v529, %v533
      %v535 = vshrl.u32 %v431, 16
      %v537 = vrot.slane %v535, 4
      %v538 = vor.u32 %v537, %v533
      %v539 = vrot.slane %v538, 4
      %v541 = vshll.u32 %v468, 16
      %v543 = vrot.slane %v541, 5
      %v544 = vsel %vm472, %v539, %v543
      %v546 = vshrl.u32 %v432, 16
      %v548 = vrot.slane %v546, 4
      %v549 = vshll.u32 %v432, 16
      %v551 = vrot.slane %v549, 5
      %v552 = vor.u32 %v548, %v551
      %v553 = vrot.slane %v552, 4
      %v555 = vshll.u32 %v433, 16
      %v557 = vrot.slane %v555, 5
      %v558 = vsel %vm472, %v553, %v557
      %v559 = vshrl.u32 %v433, 16
      %v561 = vrot.slane %v559, 4
      %v562 = vor.u32 %v561, %v557
      %v563 = vrot.slane %v562, 4
      %v565 = vshll.u32 %v469, 16
      %v567 = vrot.slane %v565, 5
      %v568 = vsel %vm472, %v563, %v567
      %s569 = scalar_lea.vmem %s1, 256
      %v570 = vld [vmem:[%s569] sm:$0xff]
      %v571 = vld [vmem:[%s569 + $0x8] sm:$0xff]
      %v572 = vld [vmem:[%s569 + $0x10] sm:$0xff]
      %v573 = vld [vmem:[%s569 + $0x18] sm:$0xff]
      %v574 = vld [vmem:[%s569 + $0x20] sm:$0xff]
      %v575 = vld [vmem:[%s569 + $0x28] sm:$0xff]
      %v576 = vld [vmem:[%s569 + $0x30] sm:$0xff]
      %v577 = vld [vmem:[%s569 + $0x38] sm:$0xff]
      %v578 = vld [vmem:[%s569 + $0x40] sm:$0xff]
      %v579 = vld [vmem:[%s569 + $0x48] sm:$0xff]
      %v580 = vld [vmem:[%s569 + $0x50] sm:$0xff]
      %v581 = vld [vmem:[%s569 + $0x58] sm:$0xff]
      %v582 = vld [vmem:[%s569 + $0x60] sm:$0xff]
      %v583 = vld [vmem:[%s569 + $0x68] sm:$0xff]
      %v584 = vld [vmem:[%s569 + $0x70] sm:$0xff]
      %v585 = vld [vmem:[%s569 + $0x78] sm:$0xff]
      %v586 = vld [vmem:[%s569 + $0x80] sm:$0xff]
      %v587 = vld [vmem:[%s569 + $0x88] sm:$0xff]
      %v588 = vld [vmem:[%s569 + $0x90] sm:$0xff]
      %v589 = vld [vmem:[%s569 + $0x98] sm:$0xff]
      %v590 = vld [vmem:[%s569 + $0xa0] sm:$0xff]
      %v591 = vld [vmem:[%s569 + $0xa8] sm:$0xff]
      %v592 = vld [vmem:[%s569 + $0xb0] sm:$0xff]
      %v593 = vld [vmem:[%s569 + $0xb8] sm:$0xff]
      %v594 = vld [vmem:[%s569 + $0xc0] sm:$0xff]
      %v595 = vld [vmem:[%s569 + $0xc8] sm:$0xff]
      %v596 = vld [vmem:[%s569 + $0xd0] sm:$0xff]
      %v597 = vld [vmem:[%s569 + $0xd8] sm:$0xff]
      %v598 = vld [vmem:[%s569 + $0xe0] sm:$0xff]
      %v599 = vld [vmem:[%s569 + $0xe8] sm:$0xff]
      %v600 = vld [vmem:[%s569 + $0xf0] sm:$0xff]
      %v601 = vld [vmem:[%s569 + $0xf8] sm:$0xff]
      %v602 = vunpack.c.l.b16 %v486
      %v603 = vunpack.c.h.b16 %v486
      %v604 = vunpack.c.l.b16 %v496
      %v605 = vunpack.c.h.b16 %v496
      %v606 = vunpack.c.l.b16 %v510
      %v607 = vunpack.c.h.b16 %v510
      %v608 = vunpack.c.l.b16 %v520
      %v609 = vunpack.c.h.b16 %v520
      %v610 = vunpack.c.l.b16 %v534
      %v611 = vunpack.c.h.b16 %v534
      %v612 = vunpack.c.l.b16 %v544
      %v613 = vunpack.c.h.b16 %v544
      %v614 = vunpack.c.l.b16 %v558
      %v615 = vunpack.c.h.b16 %v558
      %v616 = vunpack.c.l.b16 %v568
      %v617 = vunpack.c.h.b16 %v568
      %v618 = vpack.c.b16 %v604, %v602
      %v619 = vpack.c.b16 %v605, %v603
      %v620 = vpack.c.b16 %v608, %v606
      %v621 = vpack.c.b16 %v609, %v607
      %v622 = vpack.c.b16 %v612, %v610
      %v623 = vpack.c.b16 %v613, %v611
      %v624 = vpack.c.b16 %v616, %v614
      %v625 = vpack.c.b16 %v617, %v615
      %v666 = vunpack.c.l.b16 %v570
      %v667 = vunpack.c.h.b16 %v570
      %v668 = vunpack.c.l.b16 %v571
      %v669 = vunpack.c.h.b16 %v571
      %v670 = vunpack.c.l.b16 %v572
      %v671 = vunpack.c.h.b16 %v572
      %v672 = vunpack.c.l.b16 %v573
      %v673 = vunpack.c.h.b16 %v573
      %v674 = vunpack.c.l.b16 %v574
      %v675 = vunpack.c.h.b16 %v574
      %v676 = vunpack.c.l.b16 %v575
      %v677 = vunpack.c.h.b16 %v575
      %v678 = vunpack.c.l.b16 %v576
      %v679 = vunpack.c.h.b16 %v576
      %v680 = vunpack.c.l.b16 %v577
      %v681 = vunpack.c.h.b16 %v577
      %v682 = vunpack.c.l.b16 %v578
      %v683 = vunpack.c.h.b16 %v578
      %v684 = vunpack.c.l.b16 %v579
      %v685 = vunpack.c.h.b16 %v579
      %v686 = vunpack.c.l.b16 %v580
      %v687 = vunpack.c.h.b16 %v580
      %v688 = vunpack.c.l.b16 %v581
      %v689 = vunpack.c.h.b16 %v581
      %v690 = vunpack.c.l.b16 %v582
      %v691 = vunpack.c.h.b16 %v582
      %v692 = vunpack.c.l.b16 %v583
      %v693 = vunpack.c.h.b16 %v583
      %v694 = vunpack.c.l.b16 %v584
      %v695 = vunpack.c.h.b16 %v584
      %v696 = vunpack.c.l.b16 %v585
      %v697 = vunpack.c.h.b16 %v585
      %v698 = vunpack.c.l.b16 %v586
      %v699 = vunpack.c.h.b16 %v586
      %v700 = vunpack.c.l.b16 %v587
      %v701 = vunpack.c.h.b16 %v587
      %v702 = vunpack.c.l.b16 %v588
      %v703 = vunpack.c.h.b16 %v588
      %v704 = vunpack.c.l.b16 %v589
      %v705 = vunpack.c.h.b16 %v589
      %v706 = vunpack.c.l.b16 %v590
      %v707 = vunpack.c.h.b16 %v590
      %v708 = vunpack.c.l.b16 %v591
      %v709 = vunpack.c.h.b16 %v591
      %v710 = vunpack.c.l.b16 %v592
      %v711 = vunpack.c.h.b16 %v592
      %v712 = vunpack.c.l.b16 %v593
      %v713 = vunpack.c.h.b16 %v593
      %v714 = vunpack.c.l.b16 %v594
      %v715 = vunpack.c.h.b16 %v594
      %v716 = vunpack.c.l.b16 %v595
      %v717 = vunpack.c.h.b16 %v595
      %v718 = vunpack.c.l.b16 %v596
      %v719 = vunpack.c.h.b16 %v596
      %v720 = vunpack.c.l.b16 %v597
      %v721 = vunpack.c.h.b16 %v597
      %v722 = vunpack.c.l.b16 %v598
      %v723 = vunpack.c.h.b16 %v598
      %v724 = vunpack.c.l.b16 %v599
      %v725 = vunpack.c.h.b16 %v599
      %v726 = vunpack.c.l.b16 %v600
      %v727 = vunpack.c.h.b16 %v600
      %v728 = vunpack.c.l.b16 %v601
      %v729 = vunpack.c.h.b16 %v601
      %v730 = vpack.c.b16 %v668, %v666
      %v731 = vpack.c.b16 %v669, %v667
      %v732 = vpack.c.b16 %v672, %v670
      %v733 = vpack.c.b16 %v673, %v671
      %v734 = vpack.c.b16 %v676, %v674
      %v735 = vpack.c.b16 %v677, %v675
      %v736 = vpack.c.b16 %v680, %v678
      %v737 = vpack.c.b16 %v681, %v679
      %v738 = vpack.c.b16 %v684, %v682
      %v739 = vpack.c.b16 %v685, %v683
      %v740 = vpack.c.b16 %v688, %v686
      %v741 = vpack.c.b16 %v689, %v687
      %v742 = vpack.c.b16 %v692, %v690
      %v743 = vpack.c.b16 %v693, %v691
      %v744 = vpack.c.b16 %v696, %v694
      %v745 = vpack.c.b16 %v697, %v695
      %v746 = vpack.c.b16 %v700, %v698
      %v747 = vpack.c.b16 %v701, %v699
      %v748 = vpack.c.b16 %v704, %v702
      %v749 = vpack.c.b16 %v705, %v703
      %v750 = vpack.c.b16 %v708, %v706
      %v751 = vpack.c.b16 %v709, %v707
      %v752 = vpack.c.b16 %v712, %v710
      %v753 = vpack.c.b16 %v713, %v711
      %v754 = vpack.c.b16 %v716, %v714
      %v755 = vpack.c.b16 %v717, %v715
      %v756 = vpack.c.b16 %v720, %v718
      %v757 = vpack.c.b16 %v721, %v719
      %v758 = vpack.c.b16 %v724, %v722
      %v759 = vpack.c.b16 %v725, %v723
      %v760 = vpack.c.b16 %v728, %v726
      %v761 = vpack.c.b16 %v729, %v727
      %794 = vmatprep.subr.bf16.mxu0 %v745
      %795 = vmatpush1.bf16.msra.mxu0 %v744
      %796 = vmatprep.subr.bf16.mxu0 %v743
      %797 = vmatpush1.bf16.msra.mxu0 %v742
      %798 = vmatprep.subr.bf16.mxu0 %v741
      %799 = vmatpush1.bf16.msra.mxu0 %v740
      %800 = vmatprep.subr.bf16.mxu0 %v739
      %801 = vmatpush1.bf16.msra.mxu0 %v738
      %802 = vmatprep.subr.bf16.mxu0 %v737
      %803 = vmatpush1.bf16.msra.mxu0 %v736
      %804 = vmatprep.subr.bf16.mxu0 %v735
      %805 = vmatpush1.bf16.msra.mxu0 %v734
      %806 = vmatprep.subr.bf16.mxu0 %v733
      %807 = vmatpush1.bf16.msra.mxu0 %v732
      %808 = vmatprep.subr.bf16.mxu0 %v731
      %809 = vmatpush1.bf16.msra.mxu0 %v730
      %810 = vmatprep.subr.bf16.mxu0 %v761
      %811 = vmatpush2.bf16.msra.mxu0 %v760
      %812 = vmatprep.subr.bf16.mxu0 %v759
      %813 = vmatpush2.bf16.msra.mxu0 %v758
      %814 = vmatprep.subr.bf16.mxu0 %v757
      %815 = vmatpush2.bf16.msra.mxu0 %v756
      %816 = vmatprep.subr.bf16.mxu0 %v755
      %817 = vmatpush2.bf16.msra.mxu0 %v754
      %818 = vmatprep.subr.bf16.mxu0 %v753
      %819 = vmatpush2.bf16.msra.mxu0 %v752
      %820 = vmatprep.subr.bf16.mxu0 %v751
      %821 = vmatpush2.bf16.msra.mxu0 %v750
      %822 = vmatprep.subr.bf16.mxu0 %v749
      %823 = vmatpush2.bf16.msra.mxu0 %v748
      %824 = vmatprep.subr.bf16.mxu0 %v747
      %825 = vmatpush2.bf16.msra.mxu0 %v746
      %826 = vmatprep.mubr.bf16.mxu0 %v619
      %827 = vmatmul.mubr.bf16.gmra.mxu0 %v618
      %v828 = vpop.f32.mrf.mxu0
      %v829 = vadd.f32 0.0, %v828
      %v830 = vpop.f32.mrf.mxu0
      %v831 = vadd.f32 0.0, %v830
      %v832 = vpop.f32.mrf.mxu0
      %v833 = vadd.f32 0.0, %v832
      %v834 = vpop.f32.mrf.mxu0
      %v835 = vadd.f32 0.0, %v834
      %836 = vmatprep.mubr.bf16.mxu0 %v621
      %837 = vmatmul.mubr.bf16.gmra.mxu0 %v620
      %v838 = vpop.f32.mrf.mxu0
      %v839 = vadd.f32 0.0, %v838
      %v840 = vpop.f32.mrf.mxu0
      %v841 = vadd.f32 0.0, %v840
      %v842 = vpop.f32.mrf.mxu0
      %v843 = vadd.f32 0.0, %v842
      %v844 = vpop.f32.mrf.mxu0
      %v845 = vadd.f32 0.0, %v844
      %846 = vmatprep.mubr.bf16.mxu0 %v623
      %847 = vmatmul.mubr.bf16.gmra.mxu0 %v622
      %v848 = vpop.f32.mrf.mxu0
      %v849 = vadd.f32 0.0, %v848
      %v850 = vpop.f32.mrf.mxu0
      %v851 = vadd.f32 0.0, %v850
      %v852 = vpop.f32.mrf.mxu0
      %v853 = vadd.f32 0.0, %v852
      %v854 = vpop.f32.mrf.mxu0
      %v855 = vadd.f32 0.0, %v854
      %856 = vmatprep.mubr.bf16.mxu0 %v625
      %857 = vmatmul.mubr.bf16.gmra.mxu0 %v624
      %v858 = vpop.f32.mrf.mxu0
      %v859 = vadd.f32 0.0, %v858
      %v860 = vpop.f32.mrf.mxu0
      %v861 = vadd.f32 0.0, %v860
      %v862 = vpop.f32.mrf.mxu0
      %v863 = vadd.f32 0.0, %v862
      %v864 = vpop.f32.mrf.mxu0
      %v865 = vadd.f32 0.0, %v864
      %866 = vdwg.mxu0
      %v875 = vunpack.c.l.b16 %v426
      %v876 = vunpack.c.h.b16 %v426
      %v877 = vunpack.c.l.b16 %v427
      %v878 = vunpack.c.h.b16 %v427
      %v879 = vunpack.c.l.b16 %v428
      %v880 = vunpack.c.h.b16 %v428
      %v881 = vunpack.c.l.b16 %v429
      %v882 = vunpack.c.h.b16 %v429
      %v883 = vunpack.c.l.b16 %v430
      %v884 = vunpack.c.h.b16 %v430
      %v885 = vunpack.c.l.b16 %v431
      %v886 = vunpack.c.h.b16 %v431
      %v887 = vunpack.c.l.b16 %v432
      %v888 = vunpack.c.h.b16 %v432
      %v889 = vunpack.c.l.b16 %v433
      %v890 = vunpack.c.h.b16 %v433
      %v891 = vpack.c.b16 %v877, %v875
      %v892 = vpack.c.b16 %v878, %v876
      %v893 = vpack.c.b16 %v881, %v879
      %v894 = vpack.c.b16 %v882, %v880
      %v895 = vpack.c.b16 %v885, %v883
      %v896 = vpack.c.b16 %v886, %v884
      %v897 = vpack.c.b16 %v889, %v887
      %v898 = vpack.c.b16 %v890, %v888
      %v939 = vunpack.c.l.b16 %v434
      %v940 = vunpack.c.h.b16 %v434
      %v941 = vunpack.c.l.b16 %v435
      %v942 = vunpack.c.h.b16 %v435
      %v943 = vunpack.c.l.b16 %v436
      %v944 = vunpack.c.h.b16 %v436
      %v945 = vunpack.c.l.b16 %v437
      %v946 = vunpack.c.h.b16 %v437
      %v947 = vunpack.c.l.b16 %v438
      %v948 = vunpack.c.h.b16 %v438
      %v949 = vunpack.c.l.b16 %v439
      %v950 = vunpack.c.h.b16 %v439
      %v951 = vunpack.c.l.b16 %v440
      %v952 = vunpack.c.h.b16 %v440
      %v953 = vunpack.c.l.b16 %v441
      %v954 = vunpack.c.h.b16 %v441
      %v955 = vunpack.c.l.b16 %v442
      %v956 = vunpack.c.h.b16 %v442
      %v957 = vunpack.c.l.b16 %v443
      %v958 = vunpack.c.h.b16 %v443
      %v959 = vunpack.c.l.b16 %v444
      %v960 = vunpack.c.h.b16 %v444
      %v961 = vunpack.c.l.b16 %v445
      %v962 = vunpack.c.h.b16 %v445
      %v963 = vunpack.c.l.b16 %v446
      %v964 = vunpack.c.h.b16 %v446
      %v965 = vunpack.c.l.b16 %v447
      %v966 = vunpack.c.h.b16 %v447
      %v967 = vunpack.c.l.b16 %v448
      %v968 = vunpack.c.h.b16 %v448
      %v969 = vunpack.c.l.b16 %v449
      %v970 = vunpack.c.h.b16 %v449
      %v971 = vunpack.c.l.b16 %v450
      %v972 = vunpack.c.h.b16 %v450
      %v973 = vunpack.c.l.b16 %v451
      %v974 = vunpack.c.h.b16 %v451
      %v975 = vunpack.c.l.b16 %v452
      %v976 = vunpack.c.h.b16 %v452
      %v977 = vunpack.c.l.b16 %v453
      %v978 = vunpack.c.h.b16 %v453
      %v979 = vunpack.c.l.b16 %v454
      %v980 = vunpack.c.h.b16 %v454
      %v981 = vunpack.c.l.b16 %v455
      %v982 = vunpack.c.h.b16 %v455
      %v983 = vunpack.c.l.b16 %v456
      %v984 = vunpack.c.h.b16 %v456
      %v985 = vunpack.c.l.b16 %v457
      %v986 = vunpack.c.h.b16 %v457
      %v987 = vunpack.c.l.b16 %v458
      %v988 = vunpack.c.h.b16 %v458
      %v989 = vunpack.c.l.b16 %v459
      %v990 = vunpack.c.h.b16 %v459
      %v991 = vunpack.c.l.b16 %v460
      %v992 = vunpack.c.h.b16 %v460
      %v993 = vunpack.c.l.b16 %v461
      %v994 = vunpack.c.h.b16 %v461
      %v995 = vunpack.c.l.b16 %v462
      %v996 = vunpack.c.h.b16 %v462
      %v997 = vunpack.c.l.b16 %v463
      %v998 = vunpack.c.h.b16 %v463
      %v999 = vunpack.c.l.b16 %v464
      %v1000 = vunpack.c.h.b16 %v464
      %v1001 = vunpack.c.l.b16 %v465
      %v1002 = vunpack.c.h.b16 %v465
      %v1003 = vpack.c.b16 %v941, %v939
      %v1004 = vpack.c.b16 %v942, %v940
      %v1005 = vpack.c.b16 %v945, %v943
      %v1006 = vpack.c.b16 %v946, %v944
      %v1007 = vpack.c.b16 %v949, %v947
      %v1008 = vpack.c.b16 %v950, %v948
      %v1009 = vpack.c.b16 %v953, %v951
      %v1010 = vpack.c.b16 %v954, %v952
      %v1011 = vpack.c.b16 %v957, %v955
      %v1012 = vpack.c.b16 %v958, %v956
      %v1013 = vpack.c.b16 %v961, %v959
      %v1014 = vpack.c.b16 %v962, %v960
      %v1015 = vpack.c.b16 %v965, %v963
      %v1016 = vpack.c.b16 %v966, %v964
      %v1017 = vpack.c.b16 %v969, %v967
      %v1018 = vpack.c.b16 %v970, %v968
      %v1019 = vpack.c.b16 %v973, %v971
      %v1020 = vpack.c.b16 %v974, %v972
      %v1021 = vpack.c.b16 %v977, %v975
      %v1022 = vpack.c.b16 %v978, %v976
      %v1023 = vpack.c.b16 %v981, %v979
      %v1024 = vpack.c.b16 %v982, %v980
      %v1025 = vpack.c.b16 %v985, %v983
      %v1026 = vpack.c.b16 %v986, %v984
      %v1027 = vpack.c.b16 %v989, %v987
      %v1028 = vpack.c.b16 %v990, %v988
      %v1029 = vpack.c.b16 %v993, %v991
      %v1030 = vpack.c.b16 %v994, %v992
      %v1031 = vpack.c.b16 %v997, %v995
      %v1032 = vpack.c.b16 %v998, %v996
      %v1033 = vpack.c.b16 %v1001, %v999
      %v1034 = vpack.c.b16 %v1002, %v1000
      %1067 = vmatprep.subr.bf16.mxu0 %v1018
      %1068 = vmatpush1.bf16.msra.mxu0 %v1017
      %1069 = vmatprep.subr.bf16.mxu0 %v1016
      %1070 = vmatpush1.bf16.msra.mxu0 %v1015
      %1071 = vmatprep.subr.bf16.mxu0 %v1014
      %1072 = vmatpush1.bf16.msra.mxu0 %v1013
      %1073 = vmatprep.subr.bf16.mxu0 %v1012
      %1074 = vmatpush1.bf16.msra.mxu0 %v1011
      %1075 = vmatprep.subr.bf16.mxu0 %v1010
      %1076 = vmatpush1.bf16.msra.mxu0 %v1009
      %1077 = vmatprep.subr.bf16.mxu0 %v1008
      %1078 = vmatpush1.bf16.msra.mxu0 %v1007
      %1079 = vmatprep.subr.bf16.mxu0 %v1006
      %1080 = vmatpush1.bf16.msra.mxu0 %v1005
      %1081 = vmatprep.subr.bf16.mxu0 %v1004
      %1082 = vmatpush1.bf16.msra.mxu0 %v1003
      %1083 = vmatprep.subr.bf16.mxu0 %v1034
      %1084 = vmatpush2.bf16.msra.mxu0 %v1033
      %1085 = vmatprep.subr.bf16.mxu0 %v1032
      %1086 = vmatpush2.bf16.msra.mxu0 %v1031
      %1087 = vmatprep.subr.bf16.mxu0 %v1030
      %1088 = vmatpush2.bf16.msra.mxu0 %v1029
      %1089 = vmatprep.subr.bf16.mxu0 %v1028
      %1090 = vmatpush2.bf16.msra.mxu0 %v1027
      %1091 = vmatprep.subr.bf16.mxu0 %v1026
      %1092 = vmatpush2.bf16.msra.mxu0 %v1025
      %1093 = vmatprep.subr.bf16.mxu0 %v1024
      %1094 = vmatpush2.bf16.msra.mxu0 %v1023
      %1095 = vmatprep.subr.bf16.mxu0 %v1022
      %1096 = vmatpush2.bf16.msra.mxu0 %v1021
      %1097 = vmatprep.subr.bf16.mxu0 %v1020
      %1098 = vmatpush2.bf16.msra.mxu0 %v1019
      %1099 = vmatprep.mubr.bf16.mxu0 %v892
      %1100 = vmatmul.mubr.bf16.gmra.mxu0 %v891
      %v1101 = vpop.f32.mrf.mxu0
      %v1102 = vadd.f32 %v829, %v1101
      %v1103 = vpop.f32.mrf.mxu0
      %v1104 = vadd.f32 %v831, %v1103
      %v1105 = vpop.f32.mrf.mxu0
      %v1106 = vadd.f32 %v833, %v1105
      %v1107 = vpop.f32.mrf.mxu0
      %v1108 = vadd.f32 %v835, %v1107
      %1109 = vmatprep.mubr.bf16.mxu0 %v894
      %1110 = vmatmul.mubr.bf16.gmra.mxu0 %v893
      %v1111 = vpop.f32.mrf.mxu0
      %v1112 = vadd.f32 %v839, %v1111
      %v1113 = vpop.f32.mrf.mxu0
      %v1114 = vadd.f32 %v841, %v1113
      %v1115 = vpop.f32.mrf.mxu0
      %v1116 = vadd.f32 %v843, %v1115
      %v1117 = vpop.f32.mrf.mxu0
      %v1118 = vadd.f32 %v845, %v1117
      %1119 = vmatprep.mubr.bf16.mxu0 %v896
      %1120 = vmatmul.mubr.bf16.gmra.mxu0 %v895
      %v1121 = vpop.f32.mrf.mxu0
      %v1122 = vadd.f32 %v849, %v1121
      %v1123 = vpop.f32.mrf.mxu0
      %v1124 = vadd.f32 %v851, %v1123
      %v1125 = vpop.f32.mrf.mxu0
      %v1126 = vadd.f32 %v853, %v1125
      %v1127 = vpop.f32.mrf.mxu0
      %v1128 = vadd.f32 %v855, %v1127
      %1129 = vmatprep.mubr.bf16.mxu0 %v898
      %1130 = vmatmul.mubr.bf16.gmra.mxu0 %v897
      %v1131 = vpop.f32.mrf.mxu0
      %v1132 = vadd.f32 %v859, %v1131
      %v1133 = vpop.f32.mrf.mxu0
      %v1134 = vadd.f32 %v861, %v1133
      %v1135 = vpop.f32.mrf.mxu0
      %v1136 = vadd.f32 %v863, %v1135
      %v1137 = vpop.f32.mrf.mxu0
      %v1138 = vadd.f32 %v865, %v1137
      %1139 = vdwg.mxu0
      %v1140 = vld [vmem:[#allocation2] sm:$0xee]
      %v1141 = vld [vmem:[#allocation2 + $0x18] sm:$0xee]
      %v1142 = vld [vmem:[#allocation2 + $0x30] sm:$0xee]
      %v1143 = vld [vmem:[#allocation2 + $0x48] sm:$0xee]
      %vm1152 = vcmask 1042432
      %vm1153 = vcmask 1046532
      %vm1154 = vmor %vm1152, %vm1153
      %v1155 = vrot.slane %v1140, 5
      %v1156 = vrot.slane %v1155, 4
      %v1157 = vrot.slane %v427, 5
      %v1158 = vsel %vm1154, %v1156, %v1157
      %v1159 = vrot.slane %v1157, 4
      %v1160 = vrot.slane %v466, 5
      %v1161 = vsel %vm1154, %v1159, %v1160
      %v1162 = vrot.slane %v1141, 5
      %v1163 = vrot.slane %v1162, 4
      %v1164 = vrot.slane %v429, 5
      %v1165 = vsel %vm1154, %v1163, %v1164
      %v1166 = vrot.slane %v1164, 4
      %v1167 = vrot.slane %v467, 5
      %v1168 = vsel %vm1154, %v1166, %v1167
      %v1169 = vrot.slane %v1142, 5
      %v1170 = vrot.slane %v1169, 4
      %v1171 = vrot.slane %v431, 5
      %v1172 = vsel %vm1154, %v1170, %v1171
      %v1173 = vrot.slane %v1171, 4
      %v1174 = vrot.slane %v468, 5
      %v1175 = vsel %vm1154, %v1173, %v1174
      %v1176 = vrot.slane %v1143, 5
      %v1177 = vrot.slane %v1176, 4
      %v1178 = vrot.slane %v433, 5
      %v1179 = vsel %vm1154, %v1177, %v1178
      %v1180 = vrot.slane %v1178, 4
      %v1181 = vrot.slane %v469, 5
      %v1182 = vsel %vm1154, %v1180, %v1181
      %s1183 = scalar_lea.vmem %s1, 512
      %v1184 = vld [vmem:[%s1183] sm:$0xff]
      %v1185 = vld [vmem:[%s1183 + $0x8] sm:$0xff]
      %v1186 = vld [vmem:[%s1183 + $0x10] sm:$0xff]
      %v1187 = vld [vmem:[%s1183 + $0x18] sm:$0xff]
      %v1188 = vld [vmem:[%s1183 + $0x20] sm:$0xff]
      %v1189 = vld [vmem:[%s1183 + $0x28] sm:$0xff]
      %v1190 = vld [vmem:[%s1183 + $0x30] sm:$0xff]
      %v1191 = vld [vmem:[%s1183 + $0x38] sm:$0xff]
      %v1192 = vld [vmem:[%s1183 + $0x40] sm:$0xff]
      %v1193 = vld [vmem:[%s1183 + $0x48] sm:$0xff]
      %v1194 = vld [vmem:[%s1183 + $0x50] sm:$0xff]
      %v1195 = vld [vmem:[%s1183 + $0x58] sm:$0xff]
      %v1196 = vld [vmem:[%s1183 + $0x60] sm:$0xff]
      %v1197 = vld [vmem:[%s1183 + $0x68] sm:$0xff]
      %v1198 = vld [vmem:[%s1183 + $0x70] sm:$0xff]
      %v1199 = vld [vmem:[%s1183 + $0x78] sm:$0xff]
      %v1200 = vld [vmem:[%s1183 + $0x80] sm:$0xff]
      %v1201 = vld [vmem:[%s1183 + $0x88] sm:$0xff]
      %v1202 = vld [vmem:[%s1183 + $0x90] sm:$0xff]
      %v1203 = vld [vmem:[%s1183 + $0x98] sm:$0xff]
      %v1204 = vld [vmem:[%s1183 + $0xa0] sm:$0xff]
      %v1205 = vld [vmem:[%s1183 + $0xa8] sm:$0xff]
      %v1206 = vld [vmem:[%s1183 + $0xb0] sm:$0xff]
      %v1207 = vld [vmem:[%s1183 + $0xb8] sm:$0xff]
      %v1208 = vld [vmem:[%s1183 + $0xc0] sm:$0xff]
      %v1209 = vld [vmem:[%s1183 + $0xc8] sm:$0xff]
      %v1210 = vld [vmem:[%s1183 + $0xd0] sm:$0xff]
      %v1211 = vld [vmem:[%s1183 + $0xd8] sm:$0xff]
      %v1212 = vld [vmem:[%s1183 + $0xe0] sm:$0xff]
      %v1213 = vld [vmem:[%s1183 + $0xe8] sm:$0xff]
      %v1214 = vld [vmem:[%s1183 + $0xf0] sm:$0xff]
      %v1215 = vld [vmem:[%s1183 + $0xf8] sm:$0xff]
      %v1216 = vunpack.c.l.b16 %v1158
      %v1217 = vunpack.c.h.b16 %v1158
      %v1218 = vunpack.c.l.b16 %v1161
      %v1219 = vunpack.c.h.b16 %v1161
      %v1220 = vunpack.c.l.b16 %v1165
      %v1221 = vunpack.c.h.b16 %v1165
      %v1222 = vunpack.c.l.b16 %v1168
      %v1223 = vunpack.c.h.b16 %v1168
      %v1224 = vunpack.c.l.b16 %v1172
      %v1225 = vunpack.c.h.b16 %v1172
      %v1226 = vunpack.c.l.b16 %v1175
      %v1227 = vunpack.c.h.b16 %v1175
      %v1228 = vunpack.c.l.b16 %v1179
      %v1229 = vunpack.c.h.b16 %v1179
      %v1230 = vunpack.c.l.b16 %v1182
      %v1231 = vunpack.c.h.b16 %v1182
      %v1232 = vpack.c.b16 %v1218, %v1216
      %v1233 = vpack.c.b16 %v1219, %v1217
      %v1234 = vpack.c.b16 %v1222, %v1220
      %v1235 = vpack.c.b16 %v1223, %v1221
      %v1236 = vpack.c.b16 %v1226, %v1224
      %v1237 = vpack.c.b16 %v1227, %v1225
      %v1238 = vpack.c.b16 %v1230, %v1228
      %v1239 = vpack.c.b16 %v1231, %v1229
      %v1280 = vunpack.c.l.b16 %v1184
      %v1281 = vunpack.c.h.b16 %v1184
      %v1282 = vunpack.c.l.b16 %v1185
      %v1283 = vunpack.c.h.b16 %v1185
      %v1284 = vunpack.c.l.b16 %v1186
      %v1285 = vunpack.c.h.b16 %v1186
      %v1286 = vunpack.c.l.b16 %v1187
      %v1287 = vunpack.c.h.b16 %v1187
      %v1288 = vunpack.c.l.b16 %v1188
      %v1289 = vunpack.c.h.b16 %v1188
      %v1290 = vunpack.c.l.b16 %v1189
      %v1291 = vunpack.c.h.b16 %v1189
      %v1292 = vunpack.c.l.b16 %v1190
      %v1293 = vunpack.c.h.b16 %v1190
      %v1294 = vunpack.c.l.b16 %v1191
      %v1295 = vunpack.c.h.b16 %v1191
      %v1296 = vunpack.c.l.b16 %v1192
      %v1297 = vunpack.c.h.b16 %v1192
      %v1298 = vunpack.c.l.b16 %v1193
      %v1299 = vunpack.c.h.b16 %v1193
      %v1300 = vunpack.c.l.b16 %v1194
      %v1301 = vunpack.c.h.b16 %v1194
      %v1302 = vunpack.c.l.b16 %v1195
      %v1303 = vunpack.c.h.b16 %v1195
      %v1304 = vunpack.c.l.b16 %v1196
      %v1305 = vunpack.c.h.b16 %v1196
      %v1306 = vunpack.c.l.b16 %v1197
      %v1307 = vunpack.c.h.b16 %v1197
      %v1308 = vunpack.c.l.b16 %v1198
      %v1309 = vunpack.c.h.b16 %v1198
      %v1310 = vunpack.c.l.b16 %v1199
      %v1311 = vunpack.c.h.b16 %v1199
      %v1312 = vunpack.c.l.b16 %v1200
      %v1313 = vunpack.c.h.b16 %v1200
      %v1314 = vunpack.c.l.b16 %v1201
      %v1315 = vunpack.c.h.b16 %v1201
      %v1316 = vunpack.c.l.b16 %v1202
      %v1317 = vunpack.c.h.b16 %v1202
      %v1318 = vunpack.c.l.b16 %v1203
      %v1319 = vunpack.c.h.b16 %v1203
      %v1320 = vunpack.c.l.b16 %v1204
      %v1321 = vunpack.c.h.b16 %v1204
      %v1322 = vunpack.c.l.b16 %v1205
      %v1323 = vunpack.c.h.b16 %v1205
      %v1324 = vunpack.c.l.b16 %v1206
      %v1325 = vunpack.c.h.b16 %v1206
      %v1326 = vunpack.c.l.b16 %v1207
      %v1327 = vunpack.c.h.b16 %v1207
      %v1328 = vunpack.c.l.b16 %v1208
      %v1329 = vunpack.c.h.b16 %v1208
      %v1330 = vunpack.c.l.b16 %v1209
      %v1331 = vunpack.c.h.b16 %v1209
      %v1332 = vunpack.c.l.b16 %v1210
      %v1333 = vunpack.c.h.b16 %v1210
      %v1334 = vunpack.c.l.b16 %v1211
      %v1335 = vunpack.c.h.b16 %v1211
      %v1336 = vunpack.c.l.b16 %v1212
      %v1337 = vunpack.c.h.b16 %v1212
      %v1338 = vunpack.c.l.b16 %v1213
      %v1339 = vunpack.c.h.b16 %v1213
      %v1340 = vunpack.c.l.b16 %v1214
      %v1341 = vunpack.c.h.b16 %v1214
      %v1342 = vunpack.c.l.b16 %v1215
      %v1343 = vunpack.c.h.b16 %v1215
      %v1344 = vpack.c.b16 %v1282, %v1280
      %v1345 = vpack.c.b16 %v1283, %v1281
      %v1346 = vpack.c.b16 %v1286, %v1284
      %v1347 = vpack.c.b16 %v1287, %v1285
      %v1348 = vpack.c.b16 %v1290, %v1288
      %v1349 = vpack.c.b16 %v1291, %v1289
      %v1350 = vpack.c.b16 %v1294, %v1292
      %v1351 = vpack.c.b16 %v1295, %v1293
      %v1352 = vpack.c.b16 %v1298, %v1296
      %v1353 = vpack.c.b16 %v1299, %v1297
      %v1354 = vpack.c.b16 %v1302, %v1300
      %v1355 = vpack.c.b16 %v1303, %v1301
      %v1356 = vpack.c.b16 %v1306, %v1304
      %v1357 = vpack.c.b16 %v1307, %v1305
      %v1358 = vpack.c.b16 %v1310, %v1308
      %v1359 = vpack.c.b16 %v1311, %v1309
      %v1360 = vpack.c.b16 %v1314, %v1312
      %v1361 = vpack.c.b16 %v1315, %v1313
      %v1362 = vpack.c.b16 %v1318, %v1316
      %v1363 = vpack.c.b16 %v1319, %v1317
      %v1364 = vpack.c.b16 %v1322, %v1320
      %v1365 = vpack.c.b16 %v1323, %v1321
      %v1366 = vpack.c.b16 %v1326, %v1324
      %v1367 = vpack.c.b16 %v1327, %v1325
      %v1368 = vpack.c.b16 %v1330, %v1328
      %v1369 = vpack.c.b16 %v1331, %v1329
      %v1370 = vpack.c.b16 %v1334, %v1332
      %v1371 = vpack.c.b16 %v1335, %v1333
      %v1372 = vpack.c.b16 %v1338, %v1336
      %v1373 = vpack.c.b16 %v1339, %v1337
      %v1374 = vpack.c.b16 %v1342, %v1340
      %v1375 = vpack.c.b16 %v1343, %v1341
      %1408 = vmatprep.subr.bf16.mxu0 %v1359
      %1409 = vmatpush1.bf16.msra.mxu0 %v1358
      %1410 = vmatprep.subr.bf16.mxu0 %v1357
      %1411 = vmatpush1.bf16.msra.mxu0 %v1356
      %1412 = vmatprep.subr.bf16.mxu0 %v1355
      %1413 = vmatpush1.bf16.msra.mxu0 %v1354
      %1414 = vmatprep.subr.bf16.mxu0 %v1353
      %1415 = vmatpush1.bf16.msra.mxu0 %v1352
      %1416 = vmatprep.subr.bf16.mxu0 %v1351
      %1417 = vmatpush1.bf16.msra.mxu0 %v1350
      %1418 = vmatprep.subr.bf16.mxu0 %v1349
      %1419 = vmatpush1.bf16.msra.mxu0 %v1348
      %1420 = vmatprep.subr.bf16.mxu0 %v1347
      %1421 = vmatpush1.bf16.msra.mxu0 %v1346
      %1422 = vmatprep.subr.bf16.mxu0 %v1345
      %1423 = vmatpush1.bf16.msra.mxu0 %v1344
      %1424 = vmatprep.subr.bf16.mxu0 %v1375
      %1425 = vmatpush2.bf16.msra.mxu0 %v1374
      %1426 = vmatprep.subr.bf16.mxu0 %v1373
      %1427 = vmatpush2.bf16.msra.mxu0 %v1372
      %1428 = vmatprep.subr.bf16.mxu0 %v1371
      %1429 = vmatpush2.bf16.msra.mxu0 %v1370
      %1430 = vmatprep.subr.bf16.mxu0 %v1369
      %1431 = vmatpush2.bf16.msra.mxu0 %v1368
      %1432 = vmatprep.subr.bf16.mxu0 %v1367
      %1433 = vmatpush2.bf16.msra.mxu0 %v1366
      %1434 = vmatprep.subr.bf16.mxu0 %v1365
      %1435 = vmatpush2.bf16.msra.mxu0 %v1364
      %1436 = vmatprep.subr.bf16.mxu0 %v1363
      %1437 = vmatpush2.bf16.msra.mxu0 %v1362
      %1438 = vmatprep.subr.bf16.mxu0 %v1361
      %1439 = vmatpush2.bf16.msra.mxu0 %v1360
      %1440 = vmatprep.mubr.bf16.mxu0 %v1233
      %1441 = vmatmul.mubr.bf16.gmra.mxu0 %v1232
      %v1442 = vpop.f32.mrf.mxu0
      %v1443 = vadd.f32 0.0, %v1442
      %v1444 = vpop.f32.mrf.mxu0
      %v1445 = vadd.f32 0.0, %v1444
      %v1446 = vpop.f32.mrf.mxu0
      %v1447 = vadd.f32 0.0, %v1446
      %v1448 = vpop.f32.mrf.mxu0
      %v1449 = vadd.f32 0.0, %v1448
      %1450 = vmatprep.mubr.bf16.mxu0 %v1235
      %1451 = vmatmul.mubr.bf16.gmra.mxu0 %v1234
      %v1452 = vpop.f32.mrf.mxu0
      %v1453 = vadd.f32 0.0, %v1452
      %v1454 = vpop.f32.mrf.mxu0
      %v1455 = vadd.f32 0.0, %v1454
      %v1456 = vpop.f32.mrf.mxu0
      %v1457 = vadd.f32 0.0, %v1456
      %v1458 = vpop.f32.mrf.mxu0
      %v1459 = vadd.f32 0.0, %v1458
      %1460 = vmatprep.mubr.bf16.mxu0 %v1237
      %1461 = vmatmul.mubr.bf16.gmra.mxu0 %v1236
      %v1462 = vpop.f32.mrf.mxu0
      %v1463 = vadd.f32 0.0, %v1462
      %v1464 = vpop.f32.mrf.mxu0
      %v1465 = vadd.f32 0.0, %v1464
      %v1466 = vpop.f32.mrf.mxu0
      %v1467 = vadd.f32 0.0, %v1466
      %v1468 = vpop.f32.mrf.mxu0
      %v1469 = vadd.f32 0.0, %v1468
      %1470 = vmatprep.mubr.bf16.mxu0 %v1239
      %1471 = vmatmul.mubr.bf16.gmra.mxu0 %v1238
      %v1472 = vpop.f32.mrf.mxu0
      %v1473 = vadd.f32 0.0, %v1472
      %v1474 = vpop.f32.mrf.mxu0
      %v1475 = vadd.f32 0.0, %v1474
      %v1476 = vpop.f32.mrf.mxu0
      %v1477 = vadd.f32 0.0, %v1476
      %v1478 = vpop.f32.mrf.mxu0
      %v1479 = vadd.f32 0.0, %v1478
      %1480 = vdwg.mxu0
      %v1481 = vadd.f32 %v1102, %v1443
      %v1482 = vadd.f32 %v1104, %v1445
      %v1483 = vadd.f32 %v1106, %v1447
      %v1484 = vadd.f32 %v1108, %v1449
      %v1485 = vadd.f32 %v1112, %v1453
      %v1486 = vadd.f32 %v1114, %v1455
      %v1487 = vadd.f32 %v1116, %v1457
      %v1488 = vadd.f32 %v1118, %v1459
      %v1489 = vadd.f32 %v1122, %v1463
      %v1490 = vadd.f32 %v1124, %v1465
      %v1491 = vadd.f32 %v1126, %v1467
      %v1492 = vadd.f32 %v1128, %v1469
      %v1493 = vadd.f32 %v1132, %v1473
      %v1494 = vadd.f32 %v1134, %v1475
      %v1495 = vadd.f32 %v1136, %v1477
      %v1496 = vadd.f32 %v1138, %v1479
      %v1497 = vld [vmem:[%s2] sm:$0x3]
      %v1499 = vlaneseq
      %v1500 = vshrl.u32 %v1499, 7
      %v1501 = vsub.s32 0, %v1500
      %v1502 = vrot.slane %v1497, %v1501
      %v1503 = vlaneseq
      %v1504 = vshrl.u32 %v1503, 7
      %v1505 = vsub.s32 1, %v1504
      %v1506 = vrot.slane %v1497, %v1505
      %v1509 = vadd.f32 %v1481, %v1502
      %v1510 = vadd.f32 %v1482, %v1506
      %v1511 = vadd.f32 %v1483, %v1502
      %v1512 = vadd.f32 %v1484, %v1506
      %v1513 = vadd.f32 %v1485, %v1502
      %v1514 = vadd.f32 %v1486, %v1506
      %v1515 = vadd.f32 %v1487, %v1502
      %v1516 = vadd.f32 %v1488, %v1506
      %v1517 = vadd.f32 %v1489, %v1502
      %v1518 = vadd.f32 %v1490, %v1506
      %v1519 = vadd.f32 %v1491, %v1502
      %v1520 = vadd.f32 %v1492, %v1506
      %v1521 = vadd.f32 %v1493, %v1502
      %v1522 = vadd.f32 %v1494, %v1506
      %v1523 = vadd.f32 %v1495, %v1502
      %v1524 = vadd.f32 %v1496, %v1506
      %v1525 = vmax.f32 %v1509, 0.0
      %v1526 = vmax.f32 %v1510, 0.0
      %v1527 = vmax.f32 %v1511, 0.0
      %v1528 = vmax.f32 %v1512, 0.0
      %v1529 = vmax.f32 %v1513, 0.0
      %v1530 = vmax.f32 %v1514, 0.0
      %v1531 = vmax.f32 %v1515, 0.0
      %v1532 = vmax.f32 %v1516, 0.0
      %v1533 = vmax.f32 %v1517, 0.0
      %v1534 = vmax.f32 %v1518, 0.0
      %v1535 = vmax.f32 %v1519, 0.0
      %v1536 = vmax.f32 %v1520, 0.0
      %v1537 = vmax.f32 %v1521, 0.0
      %v1538 = vmax.f32 %v1522, 0.0
      %v1539 = vmax.f32 %v1523, 0.0
      %v1540 = vmax.f32 %v1524, 0.0
      %1541 = vst [vmem:[#allocation3] sm:$0xff] 0
      %1542 = vst [vmem:[#allocation3 + $0x8] sm:$0xff] 0
      %1543 = vst [vmem:[#allocation3 + $0x10] sm:$0x11] 0
      %1544 = vst [vmem:[#allocation3 + $0x18] sm:$0xff] 0
      %1545 = vst [vmem:[#allocation3 + $0x20] sm:$0xff] 0
      %1546 = vst [vmem:[#allocation3 + $0x28] sm:$0x11] 0
      %1547 = vst [vmem:[#allocation3 + $0x30] sm:$0xff] 0
      %1548 = vst [vmem:[#allocation3 + $0x38] sm:$0xff] 0
      %1549 = vst [vmem:[#allocation3 + $0x40] sm:$0x11] 0
      %1550 = vst [vmem:[#allocation3 + $0x48] sm:$0xff] 0
      %1551 = vst [vmem:[#allocation3 + $0x50] sm:$0xff] 0
      %1552 = vst [vmem:[#allocation3 + $0x58] sm:$0x11] 0
      %v1553 = vpack.c.bf16 %v1527, %v1525
      %v1554 = vpack.c.bf16 %v1528, %v1526
      %v1555 = vpack.c.bf16 %v1531, %v1529
      %v1556 = vpack.c.bf16 %v1532, %v1530
      %v1557 = vpack.c.bf16 %v1535, %v1533
      %v1558 = vpack.c.bf16 %v1536, %v1534
      %v1559 = vpack.c.bf16 %v1539, %v1537
      %v1560 = vpack.c.bf16 %v1540, %v1538
      %v1569 = vunpack.c.l.b16 %v1553
      %v1570 = vunpack.c.l.b16 %v1554
      %v1571 = vunpack.c.h.b16 %v1553
      %v1572 = vunpack.c.h.b16 %v1554
      %v1573 = vunpack.c.l.b16 %v1555
      %v1574 = vunpack.c.l.b16 %v1556
      %v1575 = vunpack.c.h.b16 %v1555
      %v1576 = vunpack.c.h.b16 %v1556
      %v1577 = vunpack.c.l.b16 %v1557
      %v1578 = vunpack.c.l.b16 %v1558
      %v1579 = vunpack.c.h.b16 %v1557
      %v1580 = vunpack.c.h.b16 %v1558
      %v1581 = vunpack.c.l.b16 %v1559
      %v1582 = vunpack.c.l.b16 %v1560
      %v1583 = vunpack.c.h.b16 %v1559
      %v1584 = vunpack.c.h.b16 %v1560
      %v1585 = vpack.c.b16 %v1570, %v1569
      %v1586 = vpack.c.b16 %v1572, %v1571
      %v1587 = vpack.c.b16 %v1574, %v1573
      %v1588 = vpack.c.b16 %v1576, %v1575
      %v1589 = vpack.c.b16 %v1578, %v1577
      %v1590 = vpack.c.b16 %v1580, %v1579
      %v1591 = vpack.c.b16 %v1582, %v1581
      %v1592 = vpack.c.b16 %v1584, %v1583
      %v1594 = vshrl.u32 %v1585, 16
      %v1596 = vrot.slane %v1594, 7
      %v1597 = vshll.u32 %v1585, 16
      %v1599 = vor.u32 %v1596, %v1597
      %v1600 = vrot.slane %v1596, 4
      %v1602 = vshrl.u32 %v1586, 16
      %v1604 = vrot.slane %v1602, 7
      %v1605 = vshll.u32 %v1586, 16
      %v1607 = vor.u32 %v1604, %v1605
      %v1608 = vsel %vm304, %v1600, %v1607
      %v1609 = vrot.slane %v1604, 4
      %v1611 = vshrl.u32 %v1587, 16
      %v1613 = vrot.slane %v1611, 7
      %v1614 = vshll.u32 %v1587, 16
      %v1616 = vor.u32 %v1613, %v1614
      %v1617 = vrot.slane %v1613, 4
      %v1619 = vshrl.u32 %v1588, 16
      %v1621 = vrot.slane %v1619, 7
      %v1622 = vshll.u32 %v1588, 16
      %v1624 = vor.u32 %v1621, %v1622
      %v1625 = vsel %vm304, %v1617, %v1624
      %v1626 = vrot.slane %v1621, 4
      %v1628 = vshrl.u32 %v1589, 16
      %v1630 = vrot.slane %v1628, 7
      %v1631 = vshll.u32 %v1589, 16
      %v1633 = vor.u32 %v1630, %v1631
      %v1634 = vrot.slane %v1630, 4
      %v1636 = vshrl.u32 %v1590, 16
      %v1638 = vrot.slane %v1636, 7
      %v1639 = vshll.u32 %v1590, 16
      %v1641 = vor.u32 %v1638, %v1639
      %v1642 = vsel %vm304, %v1634, %v1641
      %v1643 = vrot.slane %v1638, 4
      %v1645 = vshrl.u32 %v1591, 16
      %v1647 = vrot.slane %v1645, 7
      %v1648 = vshll.u32 %v1591, 16
      %v1650 = vor.u32 %v1647, %v1648
      %v1651 = vrot.slane %v1647, 4
      %v1653 = vshrl.u32 %v1592, 16
      %v1655 = vrot.slane %v1653, 7
      %v1656 = vshll.u32 %v1592, 16
      %v1658 = vor.u32 %v1655, %v1656
      %v1659 = vsel %vm304, %v1651, %v1658
      %v1660 = vrot.slane %v1655, 4
      %v1673 = vld [vmem:[#allocation3] sm:$0xff]
      %v1674 = vsel %vm391, %v1599, %v1673
      %1675 = vst [vmem:[#allocation3] sm:$0xff] %v1674
      %1676 = vst [vmem:[#allocation3 + $0x8] sm:$0xff] %v1608
      %v1677 = vld [vmem:[#allocation3 + $0x10] sm:$0x11]
      %v1678 = vsel %vm401, %v1609, %v1677
      %1679 = vst [vmem:[#allocation3 + $0x10] sm:$0x11] %v1678
      %v1680 = vld [vmem:[#allocation3 + $0x18] sm:$0xff]
      %v1681 = vsel %vm391, %v1616, %v1680
      %1682 = vst [vmem:[#allocation3 + $0x18] sm:$0xff] %v1681
      %1683 = vst [vmem:[#allocation3 + $0x20] sm:$0xff] %v1625
      %v1684 = vld [vmem:[#allocation3 + $0x28] sm:$0x11]
      %v1685 = vsel %vm401, %v1626, %v1684
      %1686 = vst [vmem:[#allocation3 + $0x28] sm:$0x11] %v1685
      %v1687 = vld [vmem:[#allocation3 + $0x30] sm:$0xff]
      %v1688 = vsel %vm391, %v1633, %v1687
      %1689 = vst [vmem:[#allocation3 + $0x30] sm:$0xff] %v1688
      %1690 = vst [vmem:[#allocation3 + $0x38] sm:$0xff] %v1642
      %v1691 = vld [vmem:[#allocation3 + $0x40] sm:$0x11]
      %v1692 = vsel %vm401, %v1643, %v1691
      %1693 = vst [vmem:[#allocation3 + $0x40] sm:$0x11] %v1692
      %v1694 = vld [vmem:[#allocation3 + $0x48] sm:$0xff]
      %v1695 = vsel %vm391, %v1650, %v1694
      %1696 = vst [vmem:[#allocation3 + $0x48] sm:$0xff] %v1695
      %1697 = vst [vmem:[#allocation3 + $0x50] sm:$0xff] %v1659
      %v1698 = vld [vmem:[#allocation3 + $0x58] sm:$0x11]
      %v1699 = vsel %vm401, %v1660, %v1698
      %1700 = vst [vmem:[#allocation3 + $0x58] sm:$0x11] %v1699
      %v1701 = vld [vmem:[#allocation3] sm:$0xff]
      %v1702 = vld [vmem:[#allocation3 + $0x8] sm:$0xff]
      %v1703 = vld [vmem:[#allocation3 + $0x18] sm:$0xff]
      %v1704 = vld [vmem:[#allocation3 + $0x20] sm:$0xff]
      %v1705 = vld [vmem:[#allocation3 + $0x30] sm:$0xff]
      %v1706 = vld [vmem:[#allocation3 + $0x38] sm:$0xff]
      %v1707 = vld [vmem:[#allocation3 + $0x48] sm:$0xff]
      %v1708 = vld [vmem:[#allocation3 + $0x50] sm:$0xff]
      %v1709 = vld [vmem:[%s3] sm:$0xff]
      %v1710 = vld [vmem:[%s3 + $0x8] sm:$0xff]
      %v1711 = vld [vmem:[%s3 + $0x10] sm:$0xff]
      %v1712 = vld [vmem:[%s3 + $0x18] sm:$0xff]
      %v1713 = vld [vmem:[%s3 + $0x20] sm:$0xff]
      %v1714 = vld [vmem:[%s3 + $0x28] sm:$0xff]
      %v1715 = vld [vmem:[%s3 + $0x30] sm:$0xff]
      %v1716 = vld [vmem:[%s3 + $0x38] sm:$0xff]
      %v1717 = vld [vmem:[%s3 + $0x40] sm:$0xff]
      %v1718 = vld [vmem:[%s3 + $0x48] sm:$0xff]
      %v1719 = vld [vmem:[%s3 + $0x50] sm:$0xff]
      %v1720 = vld [vmem:[%s3 + $0x58] sm:$0xff]
      %v1721 = vld [vmem:[%s3 + $0x60] sm:$0xff]
      %v1722 = vld [vmem:[%s3 + $0x68] sm:$0xff]
      %v1723 = vld [vmem:[%s3 + $0x70] sm:$0xff]
      %v1724 = vld [vmem:[%s3 + $0x78] sm:$0xff]
      %v1725 = vld [vmem:[%s3 + $0x80] sm:$0xff]
      %v1726 = vld [vmem:[%s3 + $0x88] sm:$0xff]
      %v1727 = vld [vmem:[%s3 + $0x90] sm:$0xff]
      %v1728 = vld [vmem:[%s3 + $0x98] sm:$0xff]
      %v1729 = vld [vmem:[%s3 + $0xa0] sm:$0xff]
      %v1730 = vld [vmem:[%s3 + $0xa8] sm:$0xff]
      %v1731 = vld [vmem:[%s3 + $0xb0] sm:$0xff]
      %v1732 = vld [vmem:[%s3 + $0xb8] sm:$0xff]
      %v1733 = vld [vmem:[%s3 + $0xc0] sm:$0xff]
      %v1734 = vld [vmem:[%s3 + $0xc8] sm:$0xff]
      %v1735 = vld [vmem:[%s3 + $0xd0] sm:$0xff]
      %v1736 = vld [vmem:[%s3 + $0xd8] sm:$0xff]
      %v1737 = vld [vmem:[%s3 + $0xe0] sm:$0xff]
      %v1738 = vld [vmem:[%s3 + $0xe8] sm:$0xff]
      %v1739 = vld [vmem:[%s3 + $0xf0] sm:$0xff]
      %v1740 = vld [vmem:[%s3 + $0xf8] sm:$0xff]
      %v1741 = vld [vmem:[#allocation3 + $0x10] sm:$0x11]
      %v1742 = vld [vmem:[#allocation3 + $0x28] sm:$0x11]
      %v1743 = vld [vmem:[#allocation3 + $0x40] sm:$0x11]
      %v1744 = vld [vmem:[#allocation3 + $0x58] sm:$0x11]
      %v1746 = vshrl.u32 %v1701, 16
      %v1748 = vrot.slane %v1746, 4
      %v1749 = vshll.u32 %v1701, 16
      %v1751 = vrot.slane %v1749, 5
      %v1752 = vor.u32 %v1748, %v1751
      %v1753 = vrot.slane %v1752, 4
      %v1755 = vshll.u32 %v1702, 16
      %v1757 = vrot.slane %v1755, 5
      %v1758 = vsel %vm472, %v1753, %v1757
      %v1759 = vshrl.u32 %v1702, 16
      %v1761 = vrot.slane %v1759, 4
      %v1762 = vor.u32 %v1761, %v1757
      %v1763 = vrot.slane %v1762, 4
      %v1765 = vshll.u32 %v1741, 16
      %v1767 = vrot.slane %v1765, 5
      %v1768 = vsel %vm472, %v1763, %v1767
      %v1770 = vshrl.u32 %v1703, 16
      %v1772 = vrot.slane %v1770, 4
      %v1773 = vshll.u32 %v1703, 16
      %v1775 = vrot.slane %v1773, 5
      %v1776 = vor.u32 %v1772, %v1775
      %v1777 = vrot.slane %v1776, 4
      %v1779 = vshll.u32 %v1704, 16
      %v1781 = vrot.slane %v1779, 5
      %v1782 = vsel %vm472, %v1777, %v1781
      %v1783 = vshrl.u32 %v1704, 16
      %v1785 = vrot.slane %v1783, 4
      %v1786 = vor.u32 %v1785, %v1781
      %v1787 = vrot.slane %v1786, 4
      %v1789 = vshll.u32 %v1742, 16
      %v1791 = vrot.slane %v1789, 5
      %v1792 = vsel %vm472, %v1787, %v1791
      %v1794 = vshrl.u32 %v1705, 16
      %v1796 = vrot.slane %v1794, 4
      %v1797 = vshll.u32 %v1705, 16
      %v1799 = vrot.slane %v1797, 5
      %v1800 = vor.u32 %v1796, %v1799
      %v1801 = vrot.slane %v1800, 4
      %v1803 = vshll.u32 %v1706, 16
      %v1805 = vrot.slane %v1803, 5
      %v1806 = vsel %vm472, %v1801, %v1805
      %v1807 = vshrl.u32 %v1706, 16
      %v1809 = vrot.slane %v1807, 4
      %v1810 = vor.u32 %v1809, %v1805
      %v1811 = vrot.slane %v1810, 4
      %v1813 = vshll.u32 %v1743, 16
      %v1815 = vrot.slane %v1813, 5
      %v1816 = vsel %vm472, %v1811, %v1815
      %v1818 = vshrl.u32 %v1707, 16
      %v1820 = vrot.slane %v1818, 4
      %v1821 = vshll.u32 %v1707, 16
      %v1823 = vrot.slane %v1821, 5
      %v1824 = vor.u32 %v1820, %v1823
      %v1825 = vrot.slane %v1824, 4
      %v1827 = vshll.u32 %v1708, 16
      %v1829 = vrot.slane %v1827, 5
      %v1830 = vsel %vm472, %v1825, %v1829
      %v1831 = vshrl.u32 %v1708, 16
      %v1833 = vrot.slane %v1831, 4
      %v1834 = vor.u32 %v1833, %v1829
      %v1835 = vrot.slane %v1834, 4
      %v1837 = vshll.u32 %v1744, 16
      %v1839 = vrot.slane %v1837, 5
      %v1840 = vsel %vm472, %v1835, %v1839
      %s1841 = scalar_lea.vmem %s3, 256
      %v1842 = vld [vmem:[%s1841] sm:$0xff]
      %v1843 = vld [vmem:[%s1841 + $0x8] sm:$0xff]
      %v1844 = vld [vmem:[%s1841 + $0x10] sm:$0xff]
      %v1845 = vld [vmem:[%s1841 + $0x18] sm:$0xff]
      %v1846 = vld [vmem:[%s1841 + $0x20] sm:$0xff]
      %v1847 = vld [vmem:[%s1841 + $0x28] sm:$0xff]
      %v1848 = vld [vmem:[%s1841 + $0x30] sm:$0xff]
      %v1849 = vld [vmem:[%s1841 + $0x38] sm:$0xff]
      %v1850 = vld [vmem:[%s1841 + $0x40] sm:$0xff]
      %v1851 = vld [vmem:[%s1841 + $0x48] sm:$0xff]
      %v1852 = vld [vmem:[%s1841 + $0x50] sm:$0xff]
      %v1853 = vld [vmem:[%s1841 + $0x58] sm:$0xff]
      %v1854 = vld [vmem:[%s1841 + $0x60] sm:$0xff]
      %v1855 = vld [vmem:[%s1841 + $0x68] sm:$0xff]
      %v1856 = vld [vmem:[%s1841 + $0x70] sm:$0xff]
      %v1857 = vld [vmem:[%s1841 + $0x78] sm:$0xff]
      %v1858 = vld [vmem:[%s1841 + $0x80] sm:$0xff]
      %v1859 = vld [vmem:[%s1841 + $0x88] sm:$0xff]
      %v1860 = vld [vmem:[%s1841 + $0x90] sm:$0xff]
      %v1861 = vld [vmem:[%s1841 + $0x98] sm:$0xff]
      %v1862 = vld [vmem:[%s1841 + $0xa0] sm:$0xff]
      %v1863 = vld [vmem:[%s1841 + $0xa8] sm:$0xff]
      %v1864 = vld [vmem:[%s1841 + $0xb0] sm:$0xff]
      %v1865 = vld [vmem:[%s1841 + $0xb8] sm:$0xff]
      %v1866 = vld [vmem:[%s1841 + $0xc0] sm:$0xff]
      %v1867 = vld [vmem:[%s1841 + $0xc8] sm:$0xff]
      %v1868 = vld [vmem:[%s1841 + $0xd0] sm:$0xff]
      %v1869 = vld [vmem:[%s1841 + $0xd8] sm:$0xff]
      %v1870 = vld [vmem:[%s1841 + $0xe0] sm:$0xff]
      %v1871 = vld [vmem:[%s1841 + $0xe8] sm:$0xff]
      %v1872 = vld [vmem:[%s1841 + $0xf0] sm:$0xff]
      %v1873 = vld [vmem:[%s1841 + $0xf8] sm:$0xff]
      %v1874 = vunpack.c.l.b16 %v1758
      %v1875 = vunpack.c.h.b16 %v1758
      %v1876 = vunpack.c.l.b16 %v1768
      %v1877 = vunpack.c.h.b16 %v1768
      %v1878 = vunpack.c.l.b16 %v1782
      %v1879 = vunpack.c.h.b16 %v1782
      %v1880 = vunpack.c.l.b16 %v1792
      %v1881 = vunpack.c.h.b16 %v1792
      %v1882 = vunpack.c.l.b16 %v1806
      %v1883 = vunpack.c.h.b16 %v1806
      %v1884 = vunpack.c.l.b16 %v1816
      %v1885 = vunpack.c.h.b16 %v1816
      %v1886 = vunpack.c.l.b16 %v1830
      %v1887 = vunpack.c.h.b16 %v1830
      %v1888 = vunpack.c.l.b16 %v1840
      %v1889 = vunpack.c.h.b16 %v1840
      %v1890 = vpack.c.b16 %v1876, %v1874
      %v1891 = vpack.c.b16 %v1877, %v1875
      %v1892 = vpack.c.b16 %v1880, %v1878
      %v1893 = vpack.c.b16 %v1881, %v1879
      %v1894 = vpack.c.b16 %v1884, %v1882
      %v1895 = vpack.c.b16 %v1885, %v1883
      %v1896 = vpack.c.b16 %v1888, %v1886
      %v1897 = vpack.c.b16 %v1889, %v1887
      %v1938 = vunpack.c.l.b16 %v1842
      %v1939 = vunpack.c.h.b16 %v1842
      %v1940 = vunpack.c.l.b16 %v1843
      %v1941 = vunpack.c.h.b16 %v1843
      %v1942 = vunpack.c.l.b16 %v1844
      %v1943 = vunpack.c.h.b16 %v1844
      %v1944 = vunpack.c.l.b16 %v1845
      %v1945 = vunpack.c.h.b16 %v1845
      %v1946 = vunpack.c.l.b16 %v1846
      %v1947 = vunpack.c.h.b16 %v1846
      %v1948 = vunpack.c.l.b16 %v1847
      %v1949 = vunpack.c.h.b16 %v1847
      %v1950 = vunpack.c.l.b16 %v1848
      %v1951 = vunpack.c.h.b16 %v1848
      %v1952 = vunpack.c.l.b16 %v1849
      %v1953 = vunpack.c.h.b16 %v1849
      %v1954 = vunpack.c.l.b16 %v1850
      %v1955 = vunpack.c.h.b16 %v1850
      %v1956 = vunpack.c.l.b16 %v1851
      %v1957 = vunpack.c.h.b16 %v1851
      %v1958 = vunpack.c.l.b16 %v1852
      %v1959 = vunpack.c.h.b16 %v1852
      %v1960 = vunpack.c.l.b16 %v1853
      %v1961 = vunpack.c.h.b16 %v1853
      %v1962 = vunpack.c.l.b16 %v1854
      %v1963 = vunpack.c.h.b16 %v1854
      %v1964 = vunpack.c.l.b16 %v1855
      %v1965 = vunpack.c.h.b16 %v1855
      %v1966 = vunpack.c.l.b16 %v1856
      %v1967 = vunpack.c.h.b16 %v1856
      %v1968 = vunpack.c.l.b16 %v1857
      %v1969 = vunpack.c.h.b16 %v1857
      %v1970 = vunpack.c.l.b16 %v1858
      %v1971 = vunpack.c.h.b16 %v1858
      %v1972 = vunpack.c.l.b16 %v1859
      %v1973 = vunpack.c.h.b16 %v1859
      %v1974 = vunpack.c.l.b16 %v1860
      %v1975 = vunpack.c.h.b16 %v1860
      %v1976 = vunpack.c.l.b16 %v1861
      %v1977 = vunpack.c.h.b16 %v1861
      %v1978 = vunpack.c.l.b16 %v1862
      %v1979 = vunpack.c.h.b16 %v1862
      %v1980 = vunpack.c.l.b16 %v1863
      %v1981 = vunpack.c.h.b16 %v1863
      %v1982 = vunpack.c.l.b16 %v1864
      %v1983 = vunpack.c.h.b16 %v1864
      %v1984 = vunpack.c.l.b16 %v1865
      %v1985 = vunpack.c.h.b16 %v1865
      %v1986 = vunpack.c.l.b16 %v1866
      %v1987 = vunpack.c.h.b16 %v1866
      %v1988 = vunpack.c.l.b16 %v1867
      %v1989 = vunpack.c.h.b16 %v1867
      %v1990 = vunpack.c.l.b16 %v1868
      %v1991 = vunpack.c.h.b16 %v1868
      %v1992 = vunpack.c.l.b16 %v1869
      %v1993 = vunpack.c.h.b16 %v1869
      %v1994 = vunpack.c.l.b16 %v1870
      %v1995 = vunpack.c.h.b16 %v1870
      %v1996 = vunpack.c.l.b16 %v1871
      %v1997 = vunpack.c.h.b16 %v1871
      %v1998 = vunpack.c.l.b16 %v1872
      %v1999 = vunpack.c.h.b16 %v1872
      %v2000 = vunpack.c.l.b16 %v1873
      %v2001 = vunpack.c.h.b16 %v1873
      %v2002 = vpack.c.b16 %v1940, %v1938
      %v2003 = vpack.c.b16 %v1941, %v1939
      %v2004 = vpack.c.b16 %v1944, %v1942
      %v2005 = vpack.c.b16 %v1945, %v1943
      %v2006 = vpack.c.b16 %v1948, %v1946
      %v2007 = vpack.c.b16 %v1949, %v1947
      %v2008 = vpack.c.b16 %v1952, %v1950
      %v2009 = vpack.c.b16 %v1953, %v1951
      %v2010 = vpack.c.b16 %v1956, %v1954
      %v2011 = vpack.c.b16 %v1957, %v1955
      %v2012 = vpack.c.b16 %v1960, %v1958
      %v2013 = vpack.c.b16 %v1961, %v1959
      %v2014 = vpack.c.b16 %v1964, %v1962
      %v2015 = vpack.c.b16 %v1965, %v1963
      %v2016 = vpack.c.b16 %v1968, %v1966
      %v2017 = vpack.c.b16 %v1969, %v1967
      %v2018 = vpack.c.b16 %v1972, %v1970
      %v2019 = vpack.c.b16 %v1973, %v1971
      %v2020 = vpack.c.b16 %v1976, %v1974
      %v2021 = vpack.c.b16 %v1977, %v1975
      %v2022 = vpack.c.b16 %v1980, %v1978
      %v2023 = vpack.c.b16 %v1981, %v1979
      %v2024 = vpack.c.b16 %v1984, %v1982
      %v2025 = vpack.c.b16 %v1985, %v1983
      %v2026 = vpack.c.b16 %v1988, %v1986
      %v2027 = vpack.c.b16 %v1989, %v1987
      %v2028 = vpack.c.b16 %v1992, %v1990
      %v2029 = vpack.c.b16 %v1993, %v1991
      %v2030 = vpack.c.b16 %v1996, %v1994
      %v2031 = vpack.c.b16 %v1997, %v1995
      %v2032 = vpack.c.b16 %v2000, %v1998
      %v2033 = vpack.c.b16 %v2001, %v1999
      %2066 = vmatprep.subr.bf16.mxu0 %v2017
      %2067 = vmatpush1.bf16.msra.mxu0 %v2016
      %2068 = vmatprep.subr.bf16.mxu0 %v2015
      %2069 = vmatpush1.bf16.msra.mxu0 %v2014
      %2070 = vmatprep.subr.bf16.mxu0 %v2013
      %2071 = vmatpush1.bf16.msra.mxu0 %v2012
      %2072 = vmatprep.subr.bf16.mxu0 %v2011
      %2073 = vmatpush1.bf16.msra.mxu0 %v2010
      %2074 = vmatprep.subr.bf16.mxu0 %v2009
      %2075 = vmatpush1.bf16.msra.mxu0 %v2008
      %2076 = vmatprep.subr.bf16.mxu0 %v2007
      %2077 = vmatpush1.bf16.msra.mxu0 %v2006
      %2078 = vmatprep.subr.bf16.mxu0 %v2005
      %2079 = vmatpush1.bf16.msra.mxu0 %v2004
      %2080 = vmatprep.subr.bf16.mxu0 %v2003
      %2081 = vmatpush1.bf16.msra.mxu0 %v2002
      %2082 = vmatprep.subr.bf16.mxu0 %v2033
      %2083 = vmatpush2.bf16.msra.mxu0 %v2032
      %2084 = vmatprep.subr.bf16.mxu0 %v2031
      %2085 = vmatpush2.bf16.msra.mxu0 %v2030
      %2086 = vmatprep.subr.bf16.mxu0 %v2029
      %2087 = vmatpush2.bf16.msra.mxu0 %v2028
      %2088 = vmatprep.subr.bf16.mxu0 %v2027
      %2089 = vmatpush2.bf16.msra.mxu0 %v2026
      %2090 = vmatprep.subr.bf16.mxu0 %v2025
      %2091 = vmatpush2.bf16.msra.mxu0 %v2024
      %2092 = vmatprep.subr.bf16.mxu0 %v2023
      %2093 = vmatpush2.bf16.msra.mxu0 %v2022
      %2094 = vmatprep.subr.bf16.mxu0 %v2021
      %2095 = vmatpush2.bf16.msra.mxu0 %v2020
      %2096 = vmatprep.subr.bf16.mxu0 %v2019
      %2097 = vmatpush2.bf16.msra.mxu0 %v2018
      %2098 = vmatprep.mubr.bf16.mxu0 %v1891
      %2099 = vmatmul.mubr.bf16.gmra.mxu0 %v1890
      %v2100 = vpop.f32.mrf.mxu0
      %v2101 = vadd.f32 0.0, %v2100
      %v2102 = vpop.f32.mrf.mxu0
      %v2103 = vadd.f32 0.0, %v2102
      %v2104 = vpop.f32.mrf.mxu0
      %v2105 = vadd.f32 0.0, %v2104
      %v2106 = vpop.f32.mrf.mxu0
      %v2107 = vadd.f32 0.0, %v2106
      %2108 = vmatprep.mubr.bf16.mxu0 %v1893
      %2109 = vmatmul.mubr.bf16.gmra.mxu0 %v1892
      %v2110 = vpop.f32.mrf.mxu0
      %v2111 = vadd.f32 0.0, %v2110
      %v2112 = vpop.f32.mrf.mxu0
      %v2113 = vadd.f32 0.0, %v2112
      %v2114 = vpop.f32.mrf.mxu0
      %v2115 = vadd.f32 0.0, %v2114
      %v2116 = vpop.f32.mrf.mxu0
      %v2117 = vadd.f32 0.0, %v2116
      %2118 = vmatprep.mubr.bf16.mxu0 %v1895
      %2119 = vmatmul.mubr.bf16.gmra.mxu0 %v1894
      %v2120 = vpop.f32.mrf.mxu0
      %v2121 = vadd.f32 0.0, %v2120
      %v2122 = vpop.f32.mrf.mxu0
      %v2123 = vadd.f32 0.0, %v2122
      %v2124 = vpop.f32.mrf.mxu0
      %v2125 = vadd.f32 0.0, %v2124
      %v2126 = vpop.f32.mrf.mxu0
      %v2127 = vadd.f32 0.0, %v2126
      %2128 = vmatprep.mubr.bf16.mxu0 %v1897
      %2129 = vmatmul.mubr.bf16.gmra.mxu0 %v1896
      %v2130 = vpop.f32.mrf.mxu0
      %v2131 = vadd.f32 0.0, %v2130
      %v2132 = vpop.f32.mrf.mxu0
      %v2133 = vadd.f32 0.0, %v2132
      %v2134 = vpop.f32.mrf.mxu0
      %v2135 = vadd.f32 0.0, %v2134
      %v2136 = vpop.f32.mrf.mxu0
      %v2137 = vadd.f32 0.0, %v2136
      %2138 = vdwg.mxu0
      %v2147 = vunpack.c.l.b16 %v1701
      %v2148 = vunpack.c.h.b16 %v1701
      %v2149 = vunpack.c.l.b16 %v1702
      %v2150 = vunpack.c.h.b16 %v1702
      %v2151 = vunpack.c.l.b16 %v1703
      %v2152 = vunpack.c.h.b16 %v1703
      %v2153 = vunpack.c.l.b16 %v1704
      %v2154 = vunpack.c.h.b16 %v1704
      %v2155 = vunpack.c.l.b16 %v1705
      %v2156 = vunpack.c.h.b16 %v1705
      %v2157 = vunpack.c.l.b16 %v1706
      %v2158 = vunpack.c.h.b16 %v1706
      %v2159 = vunpack.c.l.b16 %v1707
      %v2160 = vunpack.c.h.b16 %v1707
      %v2161 = vunpack.c.l.b16 %v1708
      %v2162 = vunpack.c.h.b16 %v1708
      %v2163 = vpack.c.b16 %v2149, %v2147
      %v2164 = vpack.c.b16 %v2150, %v2148
      %v2165 = vpack.c.b16 %v2153, %v2151
      %v2166 = vpack.c.b16 %v2154, %v2152
      %v2167 = vpack.c.b16 %v2157, %v2155
      %v2168 = vpack.c.b16 %v2158, %v2156
      %v2169 = vpack.c.b16 %v2161, %v2159
      %v2170 = vpack.c.b16 %v2162, %v2160
      %v2211 = vunpack.c.l.b16 %v1709
      %v2212 = vunpack.c.h.b16 %v1709
      %v2213 = vunpack.c.l.b16 %v1710
      %v2214 = vunpack.c.h.b16 %v1710
      %v2215 = vunpack.c.l.b16 %v1711
      %v2216 = vunpack.c.h.b16 %v1711
      %v2217 = vunpack.c.l.b16 %v1712
      %v2218 = vunpack.c.h.b16 %v1712
      %v2219 = vunpack.c.l.b16 %v1713
      %v2220 = vunpack.c.h.b16 %v1713
      %v2221 = vunpack.c.l.b16 %v1714
      %v2222 = vunpack.c.h.b16 %v1714
      %v2223 = vunpack.c.l.b16 %v1715
      %v2224 = vunpack.c.h.b16 %v1715
      %v2225 = vunpack.c.l.b16 %v1716
      %v2226 = vunpack.c.h.b16 %v1716
      %v2227 = vunpack.c.l.b16 %v1717
      %v2228 = vunpack.c.h.b16 %v1717
      %v2229 = vunpack.c.l.b16 %v1718
      %v2230 = vunpack.c.h.b16 %v1718
      %v2231 = vunpack.c.l.b16 %v1719
      %v2232 = vunpack.c.h.b16 %v1719
      %v2233 = vunpack.c.l.b16 %v1720
      %v2234 = vunpack.c.h.b16 %v1720
      %v2235 = vunpack.c.l.b16 %v1721
      %v2236 = vunpack.c.h.b16 %v1721
      %v2237 = vunpack.c.l.b16 %v1722
      %v2238 = vunpack.c.h.b16 %v1722
      %v2239 = vunpack.c.l.b16 %v1723
      %v2240 = vunpack.c.h.b16 %v1723
      %v2241 = vunpack.c.l.b16 %v1724
      %v2242 = vunpack.c.h.b16 %v1724
      %v2243 = vunpack.c.l.b16 %v1725
      %v2244 = vunpack.c.h.b16 %v1725
      %v2245 = vunpack.c.l.b16 %v1726
      %v2246 = vunpack.c.h.b16 %v1726
      %v2247 = vunpack.c.l.b16 %v1727
      %v2248 = vunpack.c.h.b16 %v1727
      %v2249 = vunpack.c.l.b16 %v1728
      %v2250 = vunpack.c.h.b16 %v1728
      %v2251 = vunpack.c.l.b16 %v1729
      %v2252 = vunpack.c.h.b16 %v1729
      %v2253 = vunpack.c.l.b16 %v1730
      %v2254 = vunpack.c.h.b16 %v1730
      %v2255 = vunpack.c.l.b16 %v1731
      %v2256 = vunpack.c.h.b16 %v1731
      %v2257 = vunpack.c.l.b16 %v1732
      %v2258 = vunpack.c.h.b16 %v1732
      %v2259 = vunpack.c.l.b16 %v1733
      %v2260 = vunpack.c.h.b16 %v1733
      %v2261 = vunpack.c.l.b16 %v1734
      %v2262 = vunpack.c.h.b16 %v1734
      %v2263 = vunpack.c.l.b16 %v1735
      %v2264 = vunpack.c.h.b16 %v1735
      %v2265 = vunpack.c.l.b16 %v1736
      %v2266 = vunpack.c.h.b16 %v1736
      %v2267 = vunpack.c.l.b16 %v1737
      %v2268 = vunpack.c.h.b16 %v1737
      %v2269 = vunpack.c.l.b16 %v1738
      %v2270 = vunpack.c.h.b16 %v1738
      %v2271 = vunpack.c.l.b16 %v1739
      %v2272 = vunpack.c.h.b16 %v1739
      %v2273 = vunpack.c.l.b16 %v1740
      %v2274 = vunpack.c.h.b16 %v1740
      %v2275 = vpack.c.b16 %v2213, %v2211
      %v2276 = vpack.c.b16 %v2214, %v2212
      %v2277 = vpack.c.b16 %v2217, %v2215
      %v2278 = vpack.c.b16 %v2218, %v2216
      %v2279 = vpack.c.b16 %v2221, %v2219
      %v2280 = vpack.c.b16 %v2222, %v2220
      %v2281 = vpack.c.b16 %v2225, %v2223
      %v2282 = vpack.c.b16 %v2226, %v2224
      %v2283 = vpack.c.b16 %v2229, %v2227
      %v2284 = vpack.c.b16 %v2230, %v2228
      %v2285 = vpack.c.b16 %v2233, %v2231
      %v2286 = vpack.c.b16 %v2234, %v2232
      %v2287 = vpack.c.b16 %v2237, %v2235
      %v2288 = vpack.c.b16 %v2238, %v2236
      %v2289 = vpack.c.b16 %v2241, %v2239
      %v2290 = vpack.c.b16 %v2242, %v2240
      %v2291 = vpack.c.b16 %v2245, %v2243
      %v2292 = vpack.c.b16 %v2246, %v2244
      %v2293 = vpack.c.b16 %v2249, %v2247
      %v2294 = vpack.c.b16 %v2250, %v2248
      %v2295 = vpack.c.b16 %v2253, %v2251
      %v2296 = vpack.c.b16 %v2254, %v2252
      %v2297 = vpack.c.b16 %v2257, %v2255
      %v2298 = vpack.c.b16 %v2258, %v2256
      %v2299 = vpack.c.b16 %v2261, %v2259
      %v2300 = vpack.c.b16 %v2262, %v2260
      %v2301 = vpack.c.b16 %v2265, %v2263
      %v2302 = vpack.c.b16 %v2266, %v2264
      %v2303 = vpack.c.b16 %v2269, %v2267
      %v2304 = vpack.c.b16 %v2270, %v2268
      %v2305 = vpack.c.b16 %v2273, %v2271
      %v2306 = vpack.c.b16 %v2274, %v2272
      %2339 = vmatprep.subr.bf16.mxu0 %v2290
      %2340 = vmatpush1.bf16.msra.mxu0 %v2289
      %2341 = vmatprep.subr.bf16.mxu0 %v2288
      %2342 = vmatpush1.bf16.msra.mxu0 %v2287
      %2343 = vmatprep.subr.bf16.mxu0 %v2286
      %2344 = vmatpush1.bf16.msra.mxu0 %v2285
      %2345 = vmatprep.subr.bf16.mxu0 %v2284
      %2346 = vmatpush1.bf16.msra.mxu0 %v2283
      %2347 = vmatprep.subr.bf16.mxu0 %v2282
      %2348 = vmatpush1.bf16.msra.mxu0 %v2281
      %2349 = vmatprep.subr.bf16.mxu0 %v2280
      %2350 = vmatpush1.bf16.msra.mxu0 %v2279
      %2351 = vmatprep.subr.bf16.mxu0 %v2278
      %2352 = vmatpush1.bf16.msra.mxu0 %v2277
      %2353 = vmatprep.subr.bf16.mxu0 %v2276
      %2354 = vmatpush1.bf16.msra.mxu0 %v2275
      %2355 = vmatprep.subr.bf16.mxu0 %v2306
      %2356 = vmatpush2.bf16.msra.mxu0 %v2305
      %2357 = vmatprep.subr.bf16.mxu0 %v2304
      %2358 = vmatpush2.bf16.msra.mxu0 %v2303
      %2359 = vmatprep.subr.bf16.mxu0 %v2302
      %2360 = vmatpush2.bf16.msra.mxu0 %v2301
      %2361 = vmatprep.subr.bf16.mxu0 %v2300
      %2362 = vmatpush2.bf16.msra.mxu0 %v2299
      %2363 = vmatprep.subr.bf16.mxu0 %v2298
      %2364 = vmatpush2.bf16.msra.mxu0 %v2297
      %2365 = vmatprep.subr.bf16.mxu0 %v2296
      %2366 = vmatpush2.bf16.msra.mxu0 %v2295
      %2367 = vmatprep.subr.bf16.mxu0 %v2294
      %2368 = vmatpush2.bf16.msra.mxu0 %v2293
      %2369 = vmatprep.subr.bf16.mxu0 %v2292
      %2370 = vmatpush2.bf16.msra.mxu0 %v2291
      %2371 = vmatprep.mubr.bf16.mxu0 %v2164
      %2372 = vmatmul.mubr.bf16.gmra.mxu0 %v2163
      %v2373 = vpop.f32.mrf.mxu0
      %v2374 = vadd.f32 %v2101, %v2373
      %v2375 = vpop.f32.mrf.mxu0
      %v2376 = vadd.f32 %v2103, %v2375
      %v2377 = vpop.f32.mrf.mxu0
      %v2378 = vadd.f32 %v2105, %v2377
      %v2379 = vpop.f32.mrf.mxu0
      %v2380 = vadd.f32 %v2107, %v2379
      %2381 = vmatprep.mubr.bf16.mxu0 %v2166
      %2382 = vmatmul.mubr.bf16.gmra.mxu0 %v2165
      %v2383 = vpop.f32.mrf.mxu0
      %v2384 = vadd.f32 %v2111, %v2383
      %v2385 = vpop.f32.mrf.mxu0
      %v2386 = vadd.f32 %v2113, %v2385
      %v2387 = vpop.f32.mrf.mxu0
      %v2388 = vadd.f32 %v2115, %v2387
      %v2389 = vpop.f32.mrf.mxu0
      %v2390 = vadd.f32 %v2117, %v2389
      %2391 = vmatprep.mubr.bf16.mxu0 %v2168
      %2392 = vmatmul.mubr.bf16.gmra.mxu0 %v2167
      %v2393 = vpop.f32.mrf.mxu0
      %v2394 = vadd.f32 %v2121, %v2393
      %v2395 = vpop.f32.mrf.mxu0
      %v2396 = vadd.f32 %v2123, %v2395
      %v2397 = vpop.f32.mrf.mxu0
      %v2398 = vadd.f32 %v2125, %v2397
      %v2399 = vpop.f32.mrf.mxu0
      %v2400 = vadd.f32 %v2127, %v2399
      %2401 = vmatprep.mubr.bf16.mxu0 %v2170
      %2402 = vmatmul.mubr.bf16.gmra.mxu0 %v2169
      %v2403 = vpop.f32.mrf.mxu0
      %v2404 = vadd.f32 %v2131, %v2403
      %v2405 = vpop.f32.mrf.mxu0
      %v2406 = vadd.f32 %v2133, %v2405
      %v2407 = vpop.f32.mrf.mxu0
      %v2408 = vadd.f32 %v2135, %v2407
      %v2409 = vpop.f32.mrf.mxu0
      %v2410 = vadd.f32 %v2137, %v2409
      %2411 = vdwg.mxu0
      %v2412 = vld [vmem:[#allocation3] sm:$0xee]
      %v2413 = vld [vmem:[#allocation3 + $0x18] sm:$0xee]
      %v2414 = vld [vmem:[#allocation3 + $0x30] sm:$0xee]
      %v2415 = vld [vmem:[#allocation3 + $0x48] sm:$0xee]
      %v2424 = vrot.slane %v2412, 5
      %v2425 = vrot.slane %v2424, 4
      %v2426 = vrot.slane %v1702, 5
      %v2427 = vsel %vm1154, %v2425, %v2426
      %v2428 = vrot.slane %v2426, 4
      %v2429 = vrot.slane %v1741, 5
      %v2430 = vsel %vm1154, %v2428, %v2429
      %v2431 = vrot.slane %v2413, 5
      %v2432 = vrot.slane %v2431, 4
      %v2433 = vrot.slane %v1704, 5
      %v2434 = vsel %vm1154, %v2432, %v2433
      %v2435 = vrot.slane %v2433, 4
      %v2436 = vrot.slane %v1742, 5
      %v2437 = vsel %vm1154, %v2435, %v2436
      %v2438 = vrot.slane %v2414, 5
      %v2439 = vrot.slane %v2438, 4
      %v2440 = vrot.slane %v1706, 5
      %v2441 = vsel %vm1154, %v2439, %v2440
      %v2442 = vrot.slane %v2440, 4
      %v2443 = vrot.slane %v1743, 5
      %v2444 = vsel %vm1154, %v2442, %v2443
      %v2445 = vrot.slane %v2415, 5
      %v2446 = vrot.slane %v2445, 4
      %v2447 = vrot.slane %v1708, 5
      %v2448 = vsel %vm1154, %v2446, %v2447
      %v2449 = vrot.slane %v2447, 4
      %v2450 = vrot.slane %v1744, 5
      %v2451 = vsel %vm1154, %v2449, %v2450
      %s2452 = scalar_lea.vmem %s3, 512
      %v2453 = vld [vmem:[%s2452] sm:$0xff]
      %v2454 = vld [vmem:[%s2452 + $0x8] sm:$0xff]
      %v2455 = vld [vmem:[%s2452 + $0x10] sm:$0xff]
      %v2456 = vld [vmem:[%s2452 + $0x18] sm:$0xff]
      %v2457 = vld [vmem:[%s2452 + $0x20] sm:$0xff]
      %v2458 = vld [vmem:[%s2452 + $0x28] sm:$0xff]
      %v2459 = vld [vmem:[%s2452 + $0x30] sm:$0xff]
      %v2460 = vld [vmem:[%s2452 + $0x38] sm:$0xff]
      %v2461 = vld [vmem:[%s2452 + $0x40] sm:$0xff]
      %v2462 = vld [vmem:[%s2452 + $0x48] sm:$0xff]
      %v2463 = vld [vmem:[%s2452 + $0x50] sm:$0xff]
      %v2464 = vld [vmem:[%s2452 + $0x58] sm:$0xff]
      %v2465 = vld [vmem:[%s2452 + $0x60] sm:$0xff]
      %v2466 = vld [vmem:[%s2452 + $0x68] sm:$0xff]
      %v2467 = vld [vmem:[%s2452 + $0x70] sm:$0xff]
      %v2468 = vld [vmem:[%s2452 + $0x78] sm:$0xff]
      %v2469 = vld [vmem:[%s2452 + $0x80] sm:$0xff]
      %v2470 = vld [vmem:[%s2452 + $0x88] sm:$0xff]
      %v2471 = vld [vmem:[%s2452 + $0x90] sm:$0xff]
      %v2472 = vld [vmem:[%s2452 + $0x98] sm:$0xff]
      %v2473 = vld [vmem:[%s2452 + $0xa0] sm:$0xff]
      %v2474 = vld [vmem:[%s2452 + $0xa8] sm:$0xff]
      %v2475 = vld [vmem:[%s2452 + $0xb0] sm:$0xff]
      %v2476 = vld [vmem:[%s2452 + $0xb8] sm:$0xff]
      %v2477 = vld [vmem:[%s2452 + $0xc0] sm:$0xff]
      %v2478 = vld [vmem:[%s2452 + $0xc8] sm:$0xff]
      %v2479 = vld [vmem:[%s2452 + $0xd0] sm:$0xff]
      %v2480 = vld [vmem:[%s2452 + $0xd8] sm:$0xff]
      %v2481 = vld [vmem:[%s2452 + $0xe0] sm:$0xff]
      %v2482 = vld [vmem:[%s2452 + $0xe8] sm:$0xff]
      %v2483 = vld [vmem:[%s2452 + $0xf0] sm:$0xff]
      %v2484 = vld [vmem:[%s2452 + $0xf8] sm:$0xff]
      %v2485 = vunpack.c.l.b16 %v2427
      %v2486 = vunpack.c.h.b16 %v2427
      %v2487 = vunpack.c.l.b16 %v2430
      %v2488 = vunpack.c.h.b16 %v2430
      %v2489 = vunpack.c.l.b16 %v2434
      %v2490 = vunpack.c.h.b16 %v2434
      %v2491 = vunpack.c.l.b16 %v2437
      %v2492 = vunpack.c.h.b16 %v2437
      %v2493 = vunpack.c.l.b16 %v2441
      %v2494 = vunpack.c.h.b16 %v2441
      %v2495 = vunpack.c.l.b16 %v2444
      %v2496 = vunpack.c.h.b16 %v2444
      %v2497 = vunpack.c.l.b16 %v2448
      %v2498 = vunpack.c.h.b16 %v2448
      %v2499 = vunpack.c.l.b16 %v2451
      %v2500 = vunpack.c.h.b16 %v2451
      %v2501 = vpack.c.b16 %v2487, %v2485
      %v2502 = vpack.c.b16 %v2488, %v2486
      %v2503 = vpack.c.b16 %v2491, %v2489
      %v2504 = vpack.c.b16 %v2492, %v2490
      %v2505 = vpack.c.b16 %v2495, %v2493
      %v2506 = vpack.c.b16 %v2496, %v2494
      %v2507 = vpack.c.b16 %v2499, %v2497
      %v2508 = vpack.c.b16 %v2500, %v2498
      %v2549 = vunpack.c.l.b16 %v2453
      %v2550 = vunpack.c.h.b16 %v2453
      %v2551 = vunpack.c.l.b16 %v2454
      %v2552 = vunpack.c.h.b16 %v2454
      %v2553 = vunpack.c.l.b16 %v2455
      %v2554 = vunpack.c.h.b16 %v2455
      %v2555 = vunpack.c.l.b16 %v2456
      %v2556 = vunpack.c.h.b16 %v2456
      %v2557 = vunpack.c.l.b16 %v2457
      %v2558 = vunpack.c.h.b16 %v2457
      %v2559 = vunpack.c.l.b16 %v2458
      %v2560 = vunpack.c.h.b16 %v2458
      %v2561 = vunpack.c.l.b16 %v2459
      %v2562 = vunpack.c.h.b16 %v2459
      %v2563 = vunpack.c.l.b16 %v2460
      %v2564 = vunpack.c.h.b16 %v2460
      %v2565 = vunpack.c.l.b16 %v2461
      %v2566 = vunpack.c.h.b16 %v2461
      %v2567 = vunpack.c.l.b16 %v2462
      %v2568 = vunpack.c.h.b16 %v2462
      %v2569 = vunpack.c.l.b16 %v2463
      %v2570 = vunpack.c.h.b16 %v2463
      %v2571 = vunpack.c.l.b16 %v2464
      %v2572 = vunpack.c.h.b16 %v2464
      %v2573 = vunpack.c.l.b16 %v2465
      %v2574 = vunpack.c.h.b16 %v2465
      %v2575 = vunpack.c.l.b16 %v2466
      %v2576 = vunpack.c.h.b16 %v2466
      %v2577 = vunpack.c.l.b16 %v2467
      %v2578 = vunpack.c.h.b16 %v2467
      %v2579 = vunpack.c.l.b16 %v2468
      %v2580 = vunpack.c.h.b16 %v2468
      %v2581 = vunpack.c.l.b16 %v2469
      %v2582 = vunpack.c.h.b16 %v2469
      %v2583 = vunpack.c.l.b16 %v2470
      %v2584 = vunpack.c.h.b16 %v2470
      %v2585 = vunpack.c.l.b16 %v2471
      %v2586 = vunpack.c.h.b16 %v2471
      %v2587 = vunpack.c.l.b16 %v2472
      %v2588 = vunpack.c.h.b16 %v2472
      %v2589 = vunpack.c.l.b16 %v2473
      %v2590 = vunpack.c.h.b16 %v2473
      %v2591 = vunpack.c.l.b16 %v2474
      %v2592 = vunpack.c.h.b16 %v2474
      %v2593 = vunpack.c.l.b16 %v2475
      %v2594 = vunpack.c.h.b16 %v2475
      %v2595 = vunpack.c.l.b16 %v2476
      %v2596 = vunpack.c.h.b16 %v2476
      %v2597 = vunpack.c.l.b16 %v2477
      %v2598 = vunpack.c.h.b16 %v2477
      %v2599 = vunpack.c.l.b16 %v2478
      %v2600 = vunpack.c.h.b16 %v2478
      %v2601 = vunpack.c.l.b16 %v2479
      %v2602 = vunpack.c.h.b16 %v2479
      %v2603 = vunpack.c.l.b16 %v2480
      %v2604 = vunpack.c.h.b16 %v2480
      %v2605 = vunpack.c.l.b16 %v2481
      %v2606 = vunpack.c.h.b16 %v2481
      %v2607 = vunpack.c.l.b16 %v2482
      %v2608 = vunpack.c.h.b16 %v2482
      %v2609 = vunpack.c.l.b16 %v2483
      %v2610 = vunpack.c.h.b16 %v2483
      %v2611 = vunpack.c.l.b16 %v2484
      %v2612 = vunpack.c.h.b16 %v2484
      %v2613 = vpack.c.b16 %v2551, %v2549
      %v2614 = vpack.c.b16 %v2552, %v2550
      %v2615 = vpack.c.b16 %v2555, %v2553
      %v2616 = vpack.c.b16 %v2556, %v2554
      %v2617 = vpack.c.b16 %v2559, %v2557
      %v2618 = vpack.c.b16 %v2560, %v2558
      %v2619 = vpack.c.b16 %v2563, %v2561
      %v2620 = vpack.c.b16 %v2564, %v2562
      %v2621 = vpack.c.b16 %v2567, %v2565
      %v2622 = vpack.c.b16 %v2568, %v2566
      %v2623 = vpack.c.b16 %v2571, %v2569
      %v2624 = vpack.c.b16 %v2572, %v2570
      %v2625 = vpack.c.b16 %v2575, %v2573
      %v2626 = vpack.c.b16 %v2576, %v2574
      %v2627 = vpack.c.b16 %v2579, %v2577
      %v2628 = vpack.c.b16 %v2580, %v2578
      %v2629 = vpack.c.b16 %v2583, %v2581
      %v2630 = vpack.c.b16 %v2584, %v2582
      %v2631 = vpack.c.b16 %v2587, %v2585
      %v2632 = vpack.c.b16 %v2588, %v2586
      %v2633 = vpack.c.b16 %v2591, %v2589
      %v2634 = vpack.c.b16 %v2592, %v2590
      %v2635 = vpack.c.b16 %v2595, %v2593
      %v2636 = vpack.c.b16 %v2596, %v2594
      %v2637 = vpack.c.b16 %v2599, %v2597
      %v2638 = vpack.c.b16 %v2600, %v2598
      %v2639 = vpack.c.b16 %v2603, %v2601
      %v2640 = vpack.c.b16 %v2604, %v2602
      %v2641 = vpack.c.b16 %v2607, %v2605
      %v2642 = vpack.c.b16 %v2608, %v2606
      %v2643 = vpack.c.b16 %v2611, %v2609
      %v2644 = vpack.c.b16 %v2612, %v2610
      %2677 = vmatprep.subr.bf16.mxu0 %v2628
      %2678 = vmatpush1.bf16.msra.mxu0 %v2627
      %2679 = vmatprep.subr.bf16.mxu0 %v2626
      %2680 = vmatpush1.bf16.msra.mxu0 %v2625
      %2681 = vmatprep.subr.bf16.mxu0 %v2624
      %2682 = vmatpush1.bf16.msra.mxu0 %v2623
      %2683 = vmatprep.subr.bf16.mxu0 %v2622
      %2684 = vmatpush1.bf16.msra.mxu0 %v2621
      %2685 = vmatprep.subr.bf16.mxu0 %v2620
      %2686 = vmatpush1.bf16.msra.mxu0 %v2619
      %2687 = vmatprep.subr.bf16.mxu0 %v2618
      %2688 = vmatpush1.bf16.msra.mxu0 %v2617
      %2689 = vmatprep.subr.bf16.mxu0 %v2616
      %2690 = vmatpush1.bf16.msra.mxu0 %v2615
      %2691 = vmatprep.subr.bf16.mxu0 %v2614
      %2692 = vmatpush1.bf16.msra.mxu0 %v2613
      %2693 = vmatprep.subr.bf16.mxu0 %v2644
      %2694 = vmatpush2.bf16.msra.mxu0 %v2643
      %2695 = vmatprep.subr.bf16.mxu0 %v2642
      %2696 = vmatpush2.bf16.msra.mxu0 %v2641
      %2697 = vmatprep.subr.bf16.mxu0 %v2640
      %2698 = vmatpush2.bf16.msra.mxu0 %v2639
      %2699 = vmatprep.subr.bf16.mxu0 %v2638
      %2700 = vmatpush2.bf16.msra.mxu0 %v2637
      %2701 = vmatprep.subr.bf16.mxu0 %v2636
      %2702 = vmatpush2.bf16.msra.mxu0 %v2635
      %2703 = vmatprep.subr.bf16.mxu0 %v2634
      %2704 = vmatpush2.bf16.msra.mxu0 %v2633
      %2705 = vmatprep.subr.bf16.mxu0 %v2632
      %2706 = vmatpush2.bf16.msra.mxu0 %v2631
      %2707 = vmatprep.subr.bf16.mxu0 %v2630
      %2708 = vmatpush2.bf16.msra.mxu0 %v2629
      %2709 = vmatprep.mubr.bf16.mxu0 %v2502
      %2710 = vmatmul.mubr.bf16.gmra.mxu0 %v2501
      %v2711 = vpop.f32.mrf.mxu0
      %v2712 = vadd.f32 0.0, %v2711
      %v2713 = vpop.f32.mrf.mxu0
      %v2714 = vadd.f32 0.0, %v2713
      %v2715 = vpop.f32.mrf.mxu0
      %v2716 = vadd.f32 0.0, %v2715
      %v2717 = vpop.f32.mrf.mxu0
      %v2718 = vadd.f32 0.0, %v2717
      %2719 = vmatprep.mubr.bf16.mxu0 %v2504
      %2720 = vmatmul.mubr.bf16.gmra.mxu0 %v2503
      %v2721 = vpop.f32.mrf.mxu0
      %v2722 = vadd.f32 0.0, %v2721
      %v2723 = vpop.f32.mrf.mxu0
      %v2724 = vadd.f32 0.0, %v2723
      %v2725 = vpop.f32.mrf.mxu0
      %v2726 = vadd.f32 0.0, %v2725
      %v2727 = vpop.f32.mrf.mxu0
      %v2728 = vadd.f32 0.0, %v2727
      %2729 = vmatprep.mubr.bf16.mxu0 %v2506
      %2730 = vmatmul.mubr.bf16.gmra.mxu0 %v2505
      %v2731 = vpop.f32.mrf.mxu0
      %v2732 = vadd.f32 0.0, %v2731
      %v2733 = vpop.f32.mrf.mxu0
      %v2734 = vadd.f32 0.0, %v2733
      %v2735 = vpop.f32.mrf.mxu0
      %v2736 = vadd.f32 0.0, %v2735
      %v2737 = vpop.f32.mrf.mxu0
      %v2738 = vadd.f32 0.0, %v2737
      %2739 = vmatprep.mubr.bf16.mxu0 %v2508
      %2740 = vmatmul.mubr.bf16.gmra.mxu0 %v2507
      %v2741 = vpop.f32.mrf.mxu0
      %v2742 = vadd.f32 0.0, %v2741
      %v2743 = vpop.f32.mrf.mxu0
      %v2744 = vadd.f32 0.0, %v2743
      %v2745 = vpop.f32.mrf.mxu0
      %v2746 = vadd.f32 0.0, %v2745
      %v2747 = vpop.f32.mrf.mxu0
      %v2748 = vadd.f32 0.0, %v2747
      %2749 = vdwg.mxu0
      %v2750 = vadd.f32 %v2374, %v2712
      %v2751 = vadd.f32 %v2376, %v2714
      %v2752 = vadd.f32 %v2378, %v2716
      %v2753 = vadd.f32 %v2380, %v2718
      %v2754 = vadd.f32 %v2384, %v2722
      %v2755 = vadd.f32 %v2386, %v2724
      %v2756 = vadd.f32 %v2388, %v2726
      %v2757 = vadd.f32 %v2390, %v2728
      %v2758 = vadd.f32 %v2394, %v2732
      %v2759 = vadd.f32 %v2396, %v2734
      %v2760 = vadd.f32 %v2398, %v2736
      %v2761 = vadd.f32 %v2400, %v2738
      %v2762 = vadd.f32 %v2404, %v2742
      %v2763 = vadd.f32 %v2406, %v2744
      %v2764 = vadd.f32 %v2408, %v2746
      %v2765 = vadd.f32 %v2410, %v2748
      %v2766 = vld [vmem:[%s4] sm:$0x3]
      %v2768 = vlaneseq
      %v2769 = vshrl.u32 %v2768, 7
      %v2770 = vsub.s32 0, %v2769
      %v2771 = vrot.slane %v2766, %v2770
      %v2772 = vlaneseq
      %v2773 = vshrl.u32 %v2772, 7
      %v2774 = vsub.s32 1, %v2773
      %v2775 = vrot.slane %v2766, %v2774
      %v2778 = vadd.f32 %v2750, %v2771
      %v2779 = vadd.f32 %v2751, %v2775
      %v2780 = vadd.f32 %v2752, %v2771
      %v2781 = vadd.f32 %v2753, %v2775
      %v2782 = vadd.f32 %v2754, %v2771
      %v2783 = vadd.f32 %v2755, %v2775
      %v2784 = vadd.f32 %v2756, %v2771
      %v2785 = vadd.f32 %v2757, %v2775
      %v2786 = vadd.f32 %v2758, %v2771
      %v2787 = vadd.f32 %v2759, %v2775
      %v2788 = vadd.f32 %v2760, %v2771
      %v2789 = vadd.f32 %v2761, %v2775
      %v2790 = vadd.f32 %v2762, %v2771
      %v2791 = vadd.f32 %v2763, %v2775
      %v2792 = vadd.f32 %v2764, %v2771
      %v2793 = vadd.f32 %v2765, %v2775
      %v2794 = vld [vmem:[%s224] sm:$0xff]
      %v2795 = vld [vmem:[%s224 + $0x8] sm:$0xff]
      %v2796 = vld [vmem:[%s224 + $0x10] sm:$0xff]
      %v2797 = vld [vmem:[%s224 + $0x18] sm:$0xff]
      %v2798 = vld [vmem:[%s224 + $0x20] sm:$0xff]
      %v2799 = vld [vmem:[%s224 + $0x28] sm:$0xff]
      %v2800 = vld [vmem:[%s224 + $0x30] sm:$0xff]
      %v2801 = vld [vmem:[%s224 + $0x38] sm:$0xff]
      %v2802 = vld [vmem:[%s224 + $0x40] sm:$0xff]
      %v2803 = vld [vmem:[%s224 + $0x48] sm:$0xff]
      %v2804 = vld [vmem:[%s224 + $0x50] sm:$0xff]
      %v2805 = vld [vmem:[%s224 + $0x58] sm:$0xff]
      %v2806 = vld [vmem:[%s224 + $0x60] sm:$0xff]
      %v2807 = vld [vmem:[%s224 + $0x68] sm:$0xff]
      %v2808 = vld [vmem:[%s224 + $0x70] sm:$0xff]
      %v2809 = vld [vmem:[%s224 + $0x78] sm:$0xff]
      %v2810 = vadd.f32 %v2794, %v2778
      %v2811 = vadd.f32 %v2795, %v2779
      %v2812 = vadd.f32 %v2796, %v2780
      %v2813 = vadd.f32 %v2797, %v2781
      %v2814 = vadd.f32 %v2798, %v2782
      %v2815 = vadd.f32 %v2799, %v2783
      %v2816 = vadd.f32 %v2800, %v2784
      %v2817 = vadd.f32 %v2801, %v2785
      %v2818 = vadd.f32 %v2802, %v2786
      %v2819 = vadd.f32 %v2803, %v2787
      %v2820 = vadd.f32 %v2804, %v2788
      %v2821 = vadd.f32 %v2805, %v2789
      %v2822 = vadd.f32 %v2806, %v2790
      %v2823 = vadd.f32 %v2807, %v2791
      %v2824 = vadd.f32 %v2808, %v2792
      %v2825 = vadd.f32 %v2809, %v2793
      %2826 = vst [vmem:[%s231] sm:$0xff] %v2810
      %2827 = vst [vmem:[%s231 + $0x8] sm:$0xff] %v2811
      %2828 = vst [vmem:[%s231 + $0x10] sm:$0xff] %v2812
      %2829 = vst [vmem:[%s231 + $0x18] sm:$0xff] %v2813
      %2830 = vst [vmem:[%s231 + $0x20] sm:$0xff] %v2814
      %2831 = vst [vmem:[%s231 + $0x28] sm:$0xff] %v2815
      %2832 = vst [vmem:[%s231 + $0x30] sm:$0xff] %v2816
      %2833 = vst [vmem:[%s231 + $0x38] sm:$0xff] %v2817
      %2834 = vst [vmem:[%s231 + $0x40] sm:$0xff] %v2818
      %2835 = vst [vmem:[%s231 + $0x48] sm:$0xff] %v2819
      %2836 = vst [vmem:[%s231 + $0x50] sm:$0xff] %v2820
      %2837 = vst [vmem:[%s231 + $0x58] sm:$0xff] %v2821
      %2838 = vst [vmem:[%s231 + $0x60] sm:$0xff] %v2822
      %2839 = vst [vmem:[%s231 + $0x68] sm:$0xff] %v2823
      %2840 = vst [vmem:[%s231 + $0x70] sm:$0xff] %v2824
      %2841 = vst [vmem:[%s231 + $0x78] sm:$0xff] %v2825
      %s2842 = smul.u32 4, %s16
      %p2843 = scmp.lt.s32.totalorder %s2842, 7
      %s2844 = scalar_select %p2843, %s2842, 7
      %s2845 = smul.addr %s2844, 4
      %s2846 = smul.addr %s2845, 8
      %s2847 = scalar_lea.vmem %s5, %s2846
      // Predicated region
      $region41: #{resblock2d_3d_forward.1} parent=39 // pred_check
        %p2848 = pneg %p144
      $region42: #{resblock2d_3d_forward.1} parent=39 // pred_check_branch
        %2850 = sbr.rel (%p2848) target = $region44
      $region43: #{resblock2d_3d_forward.1} parent=39 // pred_region
        %s2851 = smul.u32 4, %s16
      $region44: #{resblock2d_3d_forward.1} parent=39 // pred_fallthru
        _
    $region40: #{resblock2d_3d_forward.1} parent=5 // pred_fallthru
      _
    %p2852 = scmp.le.s32.totalorder 2, %s11
    // Predicated region
    $region45: #{resblock2d_3d_forward.1} parent=5 // pred_check
      %p2853 = pneg %p2852
    $region46: #{resblock2d_3d_forward.1} parent=5 // pred_check_branch
      %2855 = sbr.rel (%p2853) target = $region48
    $region47: #{resblock2d_3d_forward.1} parent=5 // pred_region
      %s2856 = ssub.s32 %s11, 2
      // Predicated region
      $region49: #{resblock2d_3d_forward.1} parent=47 // pred_check
        %p2857 = pneg %p150
      $region50: #{resblock2d_3d_forward.1} parent=47 // pred_check_branch
        %2859 = sbr.rel (%p2857) target = $region52
      $region51: #{resblock2d_3d_forward.1} parent=47 // pred_region
        %s2860 = smul.u32 4, %s17
        %p2861 = scmp.lt.s32.totalorder %s2860, 7
        %s2862 = scalar_select %p2861, %s2860, 7
        %s2863 = smul.addr %s2862, 4
        %s2864 = smul.addr %s2863, 8
        %s2865 = scalar_lea.vmem %s5, %s2864
      $region52: #{resblock2d_3d_forward.1} parent=47 // pred_fallthru
        _
    $region48: #{resblock2d_3d_forward.1} parent=5 // pred_fallthru
      _
  $region6: #{resblock2d_3d_forward.1} parent=0 // loop_footer
    %s15 = sadd.s32 1, %s11
  $region7: #{resblock2d_3d_forward.1} parent=0 // loop_footer_branch
    %10 = sbr.rel target = $region3
  $region8: #{resblock2d_3d_forward.1} parent=0 // loop_exit
    _

</llo_original>
